<compile_context>
chip_gen: v5e
topology: v5e:2x2
jax: 0.10.0
libtpu: 0.0.40
codegen_flags: <defaults>
</compile_context>

<pallas_src>
import functools

import jax
import jax.numpy as jnp
from jax import lax
from jax.experimental import pallas as pl
from jax.experimental.pallas import tpu as pltpu

EXPANSION = 4
BN_EPS = 1e-5


def _round_up(x, m):
    return (x + m - 1) // m * m


# ------------------------------ Pallas kernel ------------------------------ #

def _bottleneck_kernel(*refs, s, Ho, Wo, Rcp, has_proj, compute_dtype):
    """Fused bottleneck for one image.

    refs = (x, w1, b1, w2, b2, w3, b3, [wsc, bsc], out, *phase_scratch)
      x   : (1, H*W, Cin)   rows ordered (row-phase, col-phase, i, j), bf16
      w2  : (9, Cmid, Cmid) tap-major (dy*3+dx)
      out : (1, Ho*Wo, Cout) f32
      phase_scratch : s*s FLAT VMEM buffers (G*Rcp, Cmid) holding the
        zero-padded h1 split into (row-phase, col-phase) sub-grids; row-group
        width Rcp is a multiple of 8 so every interior store is aligned and
        every 3x3 tap is a contiguous flat slice.
    """
    if has_proj:
        (x_ref, w1_ref, b1_ref, w2_ref, b2_ref, w3_ref, b3_ref,
         wsc_ref, bsc_ref, o_ref, *hbufs) = refs
    else:
        (x_ref, w1_ref, b1_ref, w2_ref, b2_ref, w3_ref, b3_ref,
         o_ref, *hbufs) = refs
        wsc_ref = bsc_ref = None

    cmid = w1_ref.shape[1]
    base = 1                       # one leading pad row-group per phase buffer
    jw = Rcp - Wo                  # right pad / junk columns per row-group

    xc = x_ref[0]                                    # (H*W, Cin) compute dtype

    # ---- stage 1: 1x1 conv (BN scale folded into w1) + bias + ReLU --------
    h1 = jnp.dot(xc, w1_ref[...], preferred_element_type=jnp.float32)
    h1 = jnp.maximum(h1 + b1_ref[...], 0.0)          # (H*W, Cmid) f32
    h1c = h1.astype(compute_dtype)

    # ---- scatter h1 into flat, zero-padded, phase-split VMEM scratch -------
    zero2 = jnp.zeros((2 * Rcp, cmid), compute_dtype)
    zero1 = jnp.zeros((Rcp, cmid), compute_dtype)
    zeroj = jnp.zeros((jw, cmid), compute_dtype)

    for q in range(s * s):
        qr, qc = q // s, q % s
        pr, pc = (qr - 1) % s, (qc - 1) % s          # h1 phase feeding buffer q
        r0, c0 = (pr + 1) // s, (pc + 1) // s        # top / left pad amounts
        buf = hbufs[q]
        # Only the padding the taps can actually read is zeroed per step:
        # the two leading row-groups and the row-group just past the interior.
        # The interior is fully overwritten below, so no full-buffer clear.
        buf[pl.ds(0, 2 * Rcp), :] = zero2
        buf[pl.ds((base + r0 + Ho) * Rcp, Rcp), :] = zero1
        blk0 = (pr * s + pc) * Ho * Wo               # phase block start in h1
        for i in range(Ho):
            g = (base + r0 + i) * Rcp                # aligned: Rcp % 8 == 0
            buf[pl.ds(g, Wo), :] = h1c[blk0 + i * Wo: blk0 + (i + 1) * Wo, :]
            if c0:
                # right-pad / wrap columns: taps with a -1 column offset read
                # the last column of the previous row-group, so keep it zero.
                buf[pl.ds(g + Wo, jw), :] = zeroj

    # ---- stage 2: 3x3 stride-s conv as 9 MXU taps over contiguous slices ---
    Np = Ho * Rcp                      # flat rows per tap (junk cols included)
    acc = None
    for dy in range(3):
        for dx in range(3):
            q = (dy % s) * s + (dx % s)
            c0 = ((((dx % s) - 1) % s) + 1) // s
            off = (base + dy // s) * Rcp + (dx // s) - c0
            lhs = hbufs[q][pl.ds(off, Np), :]        # contiguous, no reshape
            d = jnp.dot(lhs, w2_ref[dy * 3 + dx],
                        preferred_element_type=jnp.float32)
            acc = d if acc is None else acc + d      # first tap inits acc

    # drop junk columns once, then bias + ReLU
    h2 = acc.reshape(Ho, Rcp, cmid)[:, :Wo, :].reshape(Ho * Wo, cmid)
    h2 = jnp.maximum(h2 + b2_ref[...], 0.0).astype(compute_dtype)

    # ---- stage 3: 1x1 conv + bias, shortcut, add, ReLU ---------------------
    main = jnp.dot(h2, w3_ref[...],
                   preferred_element_type=jnp.float32) + b3_ref[...]
    xs = xc[:Ho * Wo, :]                  # = x[::s, ::s] rows (phase (0,0))
    if has_proj:
        sc = jnp.dot(xs, wsc_ref[...],
                     preferred_element_type=jnp.float32) + bsc_ref[...]
    else:
        sc = xs.astype(jnp.float32)       # identity (Cin == Cout, s == 1)
    o_ref[0] = jnp.maximum(main + sc, 0.0).astype(o_ref.dtype)


# ------------------------------ parameter init ----------------------------- #

def _fold_bn(gamma, beta, mean, var):
    scale = gamma / jnp.sqrt(var + BN_EPS)
    bias = beta - mean * scale
    return scale, bias


def init_bottleneck(key, in_channels, out_channels, stride):
    """Deterministic synthetic parameters.

    Returns (raw pytorch-layout params, kernel-ready params with the BN scale
    folded into the conv weights)."""
    cmid = out_channels
    cout = out_channels * EXPANSION
    keys = jax.random.split(key, 8)

    def bn_params(k, c):
        k1, k2, k3, k4 = jax.random.split(k, 4)
        gamma = jax.random.uniform(k1, (c,), jnp.float32, 0.5, 1.5)
        beta = 0.1 * jax.random.normal(k2, (c,), jnp.float32)
        mean = 0.1 * jax.random.normal(k3, (c,), jnp.float32)
        var = jax.random.uniform(k4, (c,), jnp.float32, 0.5, 1.5)
        return (gamma, beta, mean, var)

    raw = {
        "W1": 0.1 * jax.random.normal(keys[0], (cmid, in_channels, 1, 1), jnp.float32),
        "W2": 0.1 * jax.random.normal(keys[1], (cmid, cmid, 3, 3), jnp.float32),
        "W3": 0.1 * jax.random.normal(keys[2], (cout, cmid, 1, 1), jnp.float32),
        "bn1": bn_params(keys[3], cmid),
        "bn2": bn_params(keys[4], cmid),
        "bn3": bn_params(keys[5], cout),
    }
    needs_proj = (stride != 1) or (in_channels != cout)
    if needs_proj:
        raw["Wsc"] = 0.1 * jax.random.normal(
            keys[6], (cout, in_channels, 1, 1), jnp.float32)
        raw["bnsc"] = bn_params(keys[7], cout)

    s1, b1 = _fold_bn(*raw["bn1"])
    s2, b2 = _fold_bn(*raw["bn2"])
    s3, b3 = _fold_bn(*raw["bn3"])
    params = {
        # BN scale folded into the weight columns; only bias kept separate.
        "w1": raw["W1"][:, :, 0, 0].T * s1[None, :],                     # (Cin, Cmid)
        "b1": b1[None, :],
        "w2": jnp.transpose(raw["W2"], (2, 3, 1, 0)).reshape(9, cmid, cmid)
              * s2[None, None, :],                                       # (9, Cmid, Cmid)
        "b2": b2[None, :],
        "w3": raw["W3"][:, :, 0, 0].T * s3[None, :],                     # (Cmid, Cout)
        "b3": b3[None, :],
    }
    if needs_proj:
        ssc, bsc = _fold_bn(*raw["bnsc"])
        params["wsc"] = raw["Wsc"][:, :, 0, 0].T * ssc[None, :]          # (Cin, Cout)
        params["bsc"] = bsc[None, :]
    return raw, params


# ------------------------------ forward pass ------------------------------- #

def bottleneck_forward(x_nchw, params, stride, *, compute_dtype=jnp.bfloat16):
    """Forward pass.  x_nchw: (N, Cin, H, W) f32 -> (N, Cout, Ho, Wo) f32."""
    s = int(stride)
    assert s in (1, 2), "ResNet bottleneck uses stride 1 or 2"
    x = jnp.transpose(x_nchw, (0, 2, 3, 1)).astype(jnp.float32)          # NHWC
    n, h, w, cin = x.shape
    assert h % s == 0 and w % s == 0, "spatial dims must be divisible by stride"

    cmid = params["w1"].shape[1]
    cout = params["w3"].shape[1]
    ho, wo = h // s, w // s                     # == (h + 2 - 3)//s + 1 for s|h
    has_proj = "wsc" in params
    if not has_proj:
        assert s == 1 and cin == cout, "identity shortcut needs s=1, Cin==Cout"

    # Phase-permuted, spatially-flattened input: rows ordered (pr, pc, i, j)
    # so the block [0 : ho*wo) is exactly x[::s, ::s, :] and the 1x1 convs are
    # plain 2-D matmuls.  Cast once to the compute/transport dtype (bf16): this
    # halves the dominant HBM->VMEM DMA and feeds the bf16 MXU path directly.
    xp = x.reshape(n, ho, s, wo, s, cin).transpose(0, 2, 4, 1, 3, 5)
    xp = xp.reshape(n, h * w, cin).astype(compute_dtype)

    rcp = _round_up(wo + 1, 8)       # padded row-group width (sublane aligned)
    ngroups = ho + 2 + 2 // s        # row-groups per flat phase buffer

    in_arrays = [
        xp,
        params["w1"].astype(compute_dtype), params["b1"],
        params["w2"].astype(compute_dtype), params["b2"],
        params["w3"].astype(compute_dtype), params["b3"],
    ]
    in_specs = [
        pl.BlockSpec((1, h * w, cin), lambda i: (i, 0, 0)),
        pl.BlockSpec((cin, cmid), lambda i: (0, 0)),
        pl.BlockSpec((1, cmid), lambda i: (0, 0)),
        pl.BlockSpec((9, cmid, cmid), lambda i: (0, 0, 0)),
        pl.BlockSpec((1, cmid), lambda i: (0, 0)),
        pl.BlockSpec((cmid, cout), lambda i: (0, 0)),
        pl.BlockSpec((1, cout), lambda i: (0, 0)),
    ]
    if has_proj:
        in_arrays += [params["wsc"].astype(compute_dtype), params["bsc"]]
        in_specs += [pl.BlockSpec((cin, cout), lambda i: (0, 0)),
                     pl.BlockSpec((1, cout), lambda i: (0, 0))]

    kernel = functools.partial(_bottleneck_kernel, s=s, Ho=ho, Wo=wo, Rcp=rcp,
                               has_proj=has_proj, compute_dtype=compute_dtype)

    out = pl.pallas_call(
        kernel,
        out_shape=jax.ShapeDtypeStruct((n, ho * wo, cout), jnp.float32),
        grid_spec=pltpu.PrefetchScalarGridSpec(
            num_scalar_prefetch=0,
            grid=(n,),
            in_specs=in_specs,
            out_specs=pl.BlockSpec((1, ho * wo, cout), lambda i: (i, 0, 0)),
            scratch_shapes=[pltpu.VMEM((ngroups * rcp, cmid), compute_dtype)
                            for _ in range(s * s)]),
        compiler_params=pltpu.CompilerParams(
            dimension_semantics=("parallel",),           # shard batch on v7x
            vmem_limit_bytes=48 * 1024 * 1024),          # <= v7x 64 MiB budget
    )(*in_arrays)

    out = out.reshape(n, ho, wo, cout)
    return jnp.transpose(out, (0, 3, 1, 2))              # back to NCHW


# ------------------------------ pure-JAX reference -------------------------- #

def ref_forward(x, raw, stride):
    def conv(y, w, s=1, pad=0):
        return lax.conv_general_dilated(
            y, w, (s, s), [(pad, pad), (pad, pad)],
            dimension_numbers=("NCHW", "OIHW", "NCHW"))

    def bn(y, gbmv):
        g, b, m, v = gbmv
        sc = g / jnp.sqrt(v + BN_EPS)
        return y * sc[None, :, None, None] + (b - m * sc)[None, :, None, None]

    h = jax.nn.relu(bn(conv(x, raw["W1"]), raw["bn1"]))
    h = jax.nn.relu(bn(conv(h, raw["W2"], stride, 1), raw["bn2"]))
    h = bn(conv(h, raw["W3"]), raw["bn3"])
    if "Wsc" in raw:
        sc = bn(conv(x, raw["Wsc"], stride, 0), raw["bnsc"])
    else:
        sc = x
    return jax.nn.relu(h + sc)


# ----------------------------------- main ----------------------------------- #

if __name__ == "__main__":
    key = jax.random.PRNGKey(0)

    configs = [
        # (N, Cin, H, W, out_channels, stride)
        (2, 8, 16, 16, 4, 2),     # projection shortcut (stride 2)
        (2, 16, 16, 16, 4, 1),    # identity shortcut
    ]
    for idx, (N, Cin, H, W, oc, stride) in enumerate(configs):
        k_x, k_p = jax.random.split(jax.random.fold_in(key, idx))
        x = jax.random.normal(k_x, (N, Cin, H, W), jnp.float32)
        raw, params = init_bottleneck(k_p, Cin, oc, stride)
        ref = jax.block_until_ready(ref_forward(x, raw, stride))

        # Exact-parity check of the index / padding math (f32 compute path).
        fwd32 = jax.jit(functools.partial(bottleneck_forward, stride=stride,
                                          compute_dtype=jnp.float32))
        out32 = jax.block_until_ready(fwd32(x, params))
        assert out32.shape == ref.shape, (out32.shape, ref.shape)
        err32 = float(jnp.max(jnp.abs(out32 - ref)))
        assert jnp.allclose(out32, ref, rtol=1e-4, atol=1e-4), err32

        # Fast path: bf16 transport + bf16 MXU inputs, f32 accumulation.
        fwd16 = jax.jit(functools.partial(bottleneck_forward, stride=stride))
        out16 = jax.block_until_ready(fwd16(x, params))
        err16 = float(jnp.max(jnp.abs(out16 - ref)))
        assert jnp.allclose(out16, ref, rtol=5e-2, atol=5e-2), err16

    print("KERNEL_OK")
</pallas_src>

<mosaic_0001>
module attributes {stable_mosaic.version = 11 : i64} {
  func.func @_bottleneck_kernel(%arg0: i32, %arg1: memref<1x256x8xf32, #tpu.memory_space<vmem>>, %arg2: memref<8x4xf32, #tpu.memory_space<vmem>>, %arg3: memref<1x4xf32, #tpu.memory_space<vmem>>, %arg4: memref<9x4x4xf32, #tpu.memory_space<vmem>>, %arg5: memref<1x4xf32, #tpu.memory_space<vmem>>, %arg6: memref<4x16xf32, #tpu.memory_space<vmem>>, %arg7: memref<1x16xf32, #tpu.memory_space<vmem>>, %arg8: memref<8x16xf32, #tpu.memory_space<vmem>>, %arg9: memref<1x16xf32, #tpu.memory_space<vmem>>, %arg10: memref<1x64x16xf32, #tpu.memory_space<vmem>>, %arg11: memref<176x4xf32, #tpu.memory_space<vmem>>, %arg12: memref<176x4xf32, #tpu.memory_space<vmem>>, %arg13: memref<176x4xf32, #tpu.memory_space<vmem>>, %arg14: memref<176x4xf32, #tpu.memory_space<vmem>>) attributes {dimension_semantics = [#tpu.dimension_semantics<parallel>], iteration_bounds = array<i64: 2>, scalar_prefetch = 0 : i64, scratch_operands = 4 : i64, tpu.core_type = #tpu.core_type<tc>, window_params = [{transform_indices = @transform_0, window_bounds = array<i64: 1, 256, 8>}, {pipeline_mode = #tpu.pipeline_mode<synchronous>, transform_indices = @transform_1, window_bounds = array<i64: 8, 4>}, {pipeline_mode = #tpu.pipeline_mode<synchronous>, transform_indices = @transform_2, window_bounds = array<i64: 1, 4>}, {pipeline_mode = #tpu.pipeline_mode<synchronous>, transform_indices = @transform_3, window_bounds = array<i64: 9, 4, 4>}, {pipeline_mode = #tpu.pipeline_mode<synchronous>, transform_indices = @transform_4, window_bounds = array<i64: 1, 4>}, {pipeline_mode = #tpu.pipeline_mode<synchronous>, transform_indices = @transform_5, window_bounds = array<i64: 4, 16>}, {pipeline_mode = #tpu.pipeline_mode<synchronous>, transform_indices = @transform_6, window_bounds = array<i64: 1, 16>}, {pipeline_mode = #tpu.pipeline_mode<synchronous>, transform_indices = @transform_7, window_bounds = array<i64: 8, 16>}, {pipeline_mode = #tpu.pipeline_mode<synchronous>, transform_indices = @transform_8, window_bounds = array<i64: 1, 16>}, {transform_indices = @transform_9, window_bounds = array<i64: 1, 64, 16>}]} {
    %c0 = arith.constant 0 : index
    %c0_0 = arith.constant 0 : index
    %c0_1 = arith.constant 0 : index
    %0 = vector.load %arg1[%c0, %c0_0, %c0_1] : memref<1x256x8xf32, #tpu.memory_space<vmem>>, vector<1x256x8xf32>
    %1 = vector.shape_cast %0 : vector<1x256x8xf32> to vector<256x8xf32>
    %c0_2 = arith.constant 0 : index
    %c0_3 = arith.constant 0 : index
    %2 = vector.load %arg2[%c0_2, %c0_3] : memref<8x4xf32, #tpu.memory_space<vmem>>, vector<8x4xf32>
    %cst = arith.constant dense<0.000000e+00> : vector<256x4xf32>
    %3 = tpu.matmul %1, %2, %cst {dimension_numbers = #tpu.dot_dimension_numbers<[1], [0], [0], [1], [0, 0, 1, 1], [], []>} : vector<256x8xf32>, vector<8x4xf32>, vector<256x4xf32> -> vector<256x4xf32>
    %c0_4 = arith.constant 0 : index
    %c0_5 = arith.constant 0 : index
    %4 = vector.load %arg3[%c0_4, %c0_5] : memref<1x4xf32, #tpu.memory_space<vmem>>, vector<1x4xf32>
    %5 = vector.broadcast %4 : vector<1x4xf32> to vector<256x4xf32>
    %6 = arith.addf %3, %5 : vector<256x4xf32>
    %cst_6 = arith.constant 0.000000e+00 : f32
    %7 = vector.broadcast %cst_6 : f32 to vector<256x4xf32>
    %8 = arith.maximumf %6, %7 : vector<256x4xf32>
    %cst_7 = arith.constant 0.000000e+00 : f32
    %9 = vector.broadcast %cst_7 : f32 to vector<32x4xf32>
    %cst_8 = arith.constant 0.000000e+00 : f32
    %10 = vector.broadcast %cst_8 : f32 to vector<16x4xf32>
    %cst_9 = arith.constant 0.000000e+00 : f32
    %11 = vector.broadcast %cst_9 : f32 to vector<8x4xf32>
    %c0_10 = arith.constant 0 : index
    %c0_11 = arith.constant 0 : index
    %12 = vector.load %arg11[%c0_10, %c0_11] : memref<176x4xf32, #tpu.memory_space<vmem>>, vector<32x4xf32>
    tpu.vector_store %arg11[%c0_10, %c0_11], %9 {strides = array<i32>} : memref<176x4xf32, #tpu.memory_space<vmem>>, vector<32x4xf32>,
    %c160 = arith.constant 160 : index
    %c0_12 = arith.constant 0 : index
    %13 = vector.load %arg11[%c160, %c0_12] : memref<176x4xf32, #tpu.memory_space<vmem>>, vector<16x4xf32>
    tpu.vector_store %arg11[%c160, %c0_12], %10 {strides = array<i32>} : memref<176x4xf32, #tpu.memory_space<vmem>>, vector<16x4xf32>,
    %14 = vector.extract_strided_slice %8 {offsets = [192, 0], sizes = [8, 4], strides = [1, 1]} : vector<256x4xf32> to vector<8x4xf32>
    %c32 = arith.constant 32 : index
    %c0_13 = arith.constant 0 : index
    %15 = vector.load %arg11[%c32, %c0_13] : memref<176x4xf32, #tpu.memory_space<vmem>>, vector<8x4xf32>
    tpu.vector_store %arg11[%c32, %c0_13], %14 {strides = array<i32>} : memref<176x4xf32, #tpu.memory_space<vmem>>, vector<8x4xf32>,
    %c40 = arith.constant 40 : index
    %c0_14 = arith.constant 0 : index
    %16 = vector.load %arg11[%c40, %c0_14] : memref<176x4xf32, #tpu.memory_space<vmem>>, vector<8x4xf32>
    tpu.vector_store %arg11[%c40, %c0_14], %11 {strides = array<i32>} : memref<176x4xf32, #tpu.memory_space<vmem>>, vector<8x4xf32>,
    %17 = vector.extract_strided_slice %8 {offsets = [200, 0], sizes = [8, 4], strides = [1, 1]} : vector<256x4xf32> to vector<8x4xf32>
    %c48 = arith.constant 48 : index
    %c0_15 = arith.constant 0 : index
    %18 = vector.load %arg11[%c48, %c0_15] : memref<176x4xf32, #tpu.memory_space<vmem>>, vector<8x4xf32>
    tpu.vector_store %arg11[%c48, %c0_15], %17 {strides = array<i32>} : memref<176x4xf32, #tpu.memory_space<vmem>>, vector<8x4xf32>,
    %c56 = arith.constant 56 : index
    %c0_16 = arith.constant 0 : index
    %19 = vector.load %arg11[%c56, %c0_16] : memref<176x4xf32, #tpu.memory_space<vmem>>, vector<8x4xf32>
    tpu.vector_store %arg11[%c56, %c0_16], %11 {strides = array<i32>} : memref<176x4xf32, #tpu.memory_space<vmem>>, vector<8x4xf32>,
    %20 = vector.extract_strided_slice %8 {offsets = [208, 0], sizes = [8, 4], strides = [1, 1]} : vector<256x4xf32> to vector<8x4xf32>
    %c64 = arith.constant 64 : index
    %c0_17 = arith.constant 0 : index
    %21 = vector.load %arg11[%c64, %c0_17] : memref<176x4xf32, #tpu.memory_space<vmem>>, vector<8x4xf32>
    tpu.vector_store %arg11[%c64, %c0_17], %20 {strides = array<i32>} : memref<176x4xf32, #tpu.memory_space<vmem>>, vector<8x4xf32>,
    %c72 = arith.constant 72 : index
    %c0_18 = arith.constant 0 : index
    %22 = vector.load %arg11[%c72, %c0_18] : memref<176x4xf32, #tpu.memory_space<vmem>>, vector<8x4xf32>
    tpu.vector_store %arg11[%c72, %c0_18], %11 {strides = array<i32>} : memref<176x4xf32, #tpu.memory_space<vmem>>, vector<8x4xf32>,
    %23 = vector.extract_strided_slice %8 {offsets = [216, 0], sizes = [8, 4], strides = [1, 1]} : vector<256x4xf32> to vector<8x4xf32>
    %c80 = arith.constant 80 : index
    %c0_19 = arith.constant 0 : index
    %24 = vector.load %arg11[%c80, %c0_19] : memref<176x4xf32, #tpu.memory_space<vmem>>, vector<8x4xf32>
    tpu.vector_store %arg11[%c80, %c0_19], %23 {strides = array<i32>} : memref<176x4xf32, #tpu.memory_space<vmem>>, vector<8x4xf32>,
    %c88 = arith.constant 88 : index
    %c0_20 = arith.constant 0 : index
    %25 = vector.load %arg11[%c88, %c0_20] : memref<176x4xf32, #tpu.memory_space<vmem>>, vector<8x4xf32>
    tpu.vector_store %arg11[%c88, %c0_20], %11 {strides = array<i32>} : memref<176x4xf32, #tpu.memory_space<vmem>>, vector<8x4xf32>,
    %26 = vector.extract_strided_slice %8 {offsets = [224, 0], sizes = [8, 4], strides = [1, 1]} : vector<256x4xf32> to vector<8x4xf32>
    %c96 = arith.constant 96 : index
    %c0_21 = arith.constant 0 : index
    %27 = vector.load %arg11[%c96, %c0_21] : memref<176x4xf32, #tpu.memory_space<vmem>>, vector<8x4xf32>
    tpu.vector_store %arg11[%c96, %c0_21], %26 {strides = array<i32>} : memref<176x4xf32, #tpu.memory_space<vmem>>, vector<8x4xf32>,
    %c104 = arith.constant 104 : index
    %c0_22 = arith.constant 0 : index
    %28 = vector.load %arg11[%c104, %c0_22] : memref<176x4xf32, #tpu.memory_space<vmem>>, vector<8x4xf32>
    tpu.vector_store %arg11[%c104, %c0_22], %11 {strides = array<i32>} : memref<176x4xf32, #tpu.memory_space<vmem>>, vector<8x4xf32>,
    %29 = vector.extract_strided_slice %8 {offsets = [232, 0], sizes = [8, 4], strides = [1, 1]} : vector<256x4xf32> to vector<8x4xf32>
    %c112 = arith.constant 112 : index
    %c0_23 = arith.constant 0 : index
    %30 = vector.load %arg11[%c112, %c0_23] : memref<176x4xf32, #tpu.memory_space<vmem>>, vector<8x4xf32>
    tpu.vector_store %arg11[%c112, %c0_23], %29 {strides = array<i32>} : memref<176x4xf32, #tpu.memory_space<vmem>>, vector<8x4xf32>,
    %c120 = arith.constant 120 : index
    %c0_24 = arith.constant 0 : index
    %31 = vector.load %arg11[%c120, %c0_24] : memref<176x4xf32, #tpu.memory_space<vmem>>, vector<8x4xf32>
    tpu.vector_store %arg11[%c120, %c0_24], %11 {strides = array<i32>} : memref<176x4xf32, #tpu.memory_space<vmem>>, vector<8x4xf32>,
    %32 = vector.extract_strided_slice %8 {offsets = [240, 0], sizes = [8, 4], strides = [1, 1]} : vector<256x4xf32> to vector<8x4xf32>
    %c128 = arith.constant 128 : index
    %c0_25 = arith.constant 0 : index
    %33 = vector.load %arg11[%c128, %c0_25] : memref<176x4xf32, #tpu.memory_space<vmem>>, vector<8x4xf32>
    tpu.vector_store %arg11[%c128, %c0_25], %32 {strides = array<i32>} : memref<176x4xf32, #tpu.memory_space<vmem>>, vector<8x4xf32>,
    %c136 = arith.constant 136 : index
    %c0_26 = arith.constant 0 : index
    %34 = vector.load %arg11[%c136, %c0_26] : memref<176x4xf32, #tpu.memory_space<vmem>>, vector<8x4xf32>
    tpu.vector_store %arg11[%c136, %c0_26], %11 {strides = array<i32>} : memref<176x4xf32, #tpu.memory_space<vmem>>, vector<8x4xf32>,
    %35 = vector.extract_strided_slice %8 {offsets = [248, 0], sizes = [8, 4], strides = [1, 1]} : vector<256x4xf32> to vector<8x4xf32>
    %c144 = arith.constant 144 : index
    %c0_27 = arith.constant 0 : index
    %36 = vector.load %arg11[%c144, %c0_27] : memref<176x4xf32, #tpu.memory_space<vmem>>, vector<8x4xf32>
    tpu.vector_store %arg11[%c144, %c0_27], %35 {strides = array<i32>} : memref<176x4xf32, #tpu.memory_space<vmem>>, vector<8x4xf32>,
    %c152 = arith.constant 152 : index
    %c0_28 = arith.constant 0 : index
    %37 = vector.load %arg11[%c152, %c0_28] : memref<176x4xf32, #tpu.memory_space<vmem>>, vector<8x4xf32>
    tpu.vector_store %arg11[%c152, %c0_28], %11 {strides = array<i32>} : memref<176x4xf32, #tpu.memory_space<vmem>>, vector<8x4xf32>,
    %c0_29 = arith.constant 0 : index
    %c0_30 = arith.constant 0 : index
    %38 = vector.load %arg12[%c0_29, %c0_30] : memref<176x4xf32, #tpu.memory_space<vmem>>, vector<32x4xf32>
    tpu.vector_store %arg12[%c0_29, %c0_30], %9 {strides = array<i32>} : memref<176x4xf32, #tpu.memory_space<vmem>>, vector<32x4xf32>,
    %c160_31 = arith.constant 160 : index
    %c0_32 = arith.constant 0 : index
    %39 = vector.load %arg12[%c160_31, %c0_32] : memref<176x4xf32, #tpu.memory_space<vmem>>, vector<16x4xf32>
    tpu.vector_store %arg12[%c160_31, %c0_32], %10 {strides = array<i32>} : memref<176x4xf32, #tpu.memory_space<vmem>>, vector<16x4xf32>,
    %40 = vector.extract_strided_slice %8 {offsets = [128, 0], sizes = [8, 4], strides = [1, 1]} : vector<256x4xf32> to vector<8x4xf32>
    %c32_33 = arith.constant 32 : index
    %c0_34 = arith.constant 0 : index
    %41 = vector.load %arg12[%c32_33, %c0_34] : memref<176x4xf32, #tpu.memory_space<vmem>>, vector<8x4xf32>
    tpu.vector_store %arg12[%c32_33, %c0_34], %40 {strides = array<i32>} : memref<176x4xf32, #tpu.memory_space<vmem>>, vector<8x4xf32>,
    %42 = vector.extract_strided_slice %8 {offsets = [136, 0], sizes = [8, 4], strides = [1, 1]} : vector<256x4xf32> to vector<8x4xf32>
    %c48_35 = arith.constant 48 : index
    %c0_36 = arith.constant 0 : index
    %43 = vector.load %arg12[%c48_35, %c0_36] : memref<176x4xf32, #tpu.memory_space<vmem>>, vector<8x4xf32>
    tpu.vector_store %arg12[%c48_35, %c0_36], %42 {strides = array<i32>} : memref<176x4xf32, #tpu.memory_space<vmem>>, vector<8x4xf32>,
    %44 = vector.extract_strided_slice %8 {offsets = [144, 0], sizes = [8, 4], strides = [1, 1]} : vector<256x4xf32> to vector<8x4xf32>
    %c64_37 = arith.constant 64 : index
    %c0_38 = arith.constant 0 : index
    %45 = vector.load %arg12[%c64_37, %c0_38] : memref<176x4xf32, #tpu.memory_space<vmem>>, vector<8x4xf32>
    tpu.vector_store %arg12[%c64_37, %c0_38], %44 {strides = array<i32>} : memref<176x4xf32, #tpu.memory_space<vmem>>, vector<8x4xf32>,
    %46 = vector.extract_strided_slice %8 {offsets = [152, 0], sizes = [8, 4], strides = [1, 1]} : vector<256x4xf32> to vector<8x4xf32>
    %c80_39 = arith.constant 80 : index
    %c0_40 = arith.constant 0 : index
    %47 = vector.load %arg12[%c80_39, %c0_40] : memref<176x4xf32, #tpu.memory_space<vmem>>, vector<8x4xf32>
    tpu.vector_store %arg12[%c80_39, %c0_40], %46 {strides = array<i32>} : memref<176x4xf32, #tpu.memory_space<vmem>>, vector<8x4xf32>,
    %48 = vector.extract_strided_slice %8 {offsets = [160, 0], sizes = [8, 4], strides = [1, 1]} : vector<256x4xf32> to vector<8x4xf32>
    %c96_41 = arith.constant 96 : index
    %c0_42 = arith.constant 0 : index
    %49 = vector.load %arg12[%c96_41, %c0_42] : memref<176x4xf32, #tpu.memory_space<vmem>>, vector<8x4xf32>
    tpu.vector_store %arg12[%c96_41, %c0_42], %48 {strides = array<i32>} : memref<176x4xf32, #tpu.memory_space<vmem>>, vector<8x4xf32>,
    %50 = vector.extract_strided_slice %8 {offsets = [168, 0], sizes = [8, 4], strides = [1, 1]} : vector<256x4xf32> to vector<8x4xf32>
    %c112_43 = arith.constant 112 : index
    %c0_44 = arith.constant 0 : index
    %51 = vector.load %arg12[%c112_43, %c0_44] : memref<176x4xf32, #tpu.memory_space<vmem>>, vector<8x4xf32>
    tpu.vector_store %arg12[%c112_43, %c0_44], %50 {strides = array<i32>} : memref<176x4xf32, #tpu.memory_space<vmem>>, vector<8x4xf32>,
    %52 = vector.extract_strided_slice %8 {offsets = [176, 0], sizes = [8, 4], strides = [1, 1]} : vector<256x4xf32> to vector<8x4xf32>
    %c128_45 = arith.constant 128 : index
    %c0_46 = arith.constant 0 : index
    %53 = vector.load %arg12[%c128_45, %c0_46] : memref<176x4xf32, #tpu.memory_space<vmem>>, vector<8x4xf32>
    tpu.vector_store %arg12[%c128_45, %c0_46], %52 {strides = array<i32>} : memref<176x4xf32, #tpu.memory_space<vmem>>, vector<8x4xf32>,
    %54 = vector.extract_strided_slice %8 {offsets = [184, 0], sizes = [8, 4], strides = [1, 1]} : vector<256x4xf32> to vector<8x4xf32>
    %c144_47 = arith.constant 144 : index
    %c0_48 = arith.constant 0 : index
    %55 = vector.load %arg12[%c144_47, %c0_48] : memref<176x4xf32, #tpu.memory_space<vmem>>, vector<8x4xf32>
    tpu.vector_store %arg12[%c144_47, %c0_48], %54 {strides = array<i32>} : memref<176x4xf32, #tpu.memory_space<vmem>>, vector<8x4xf32>,
    %c0_49 = arith.constant 0 : index
    %c0_50 = arith.constant 0 : index
    %56 = vector.load %arg13[%c0_49, %c0_50] : memref<176x4xf32, #tpu.memory_space<vmem>>, vector<32x4xf32>
    tpu.vector_store %arg13[%c0_49, %c0_50], %9 {strides = array<i32>} : memref<176x4xf32, #tpu.memory_space<vmem>>, vector<32x4xf32>,
    %c144_51 = arith.constant 144 : index
    %c0_52 = arith.constant 0 : index
    %57 = vector.load %arg13[%c144_51, %c0_52] : memref<176x4xf32, #tpu.memory_space<vmem>>, vector<16x4xf32>
    tpu.vector_store %arg13[%c144_51, %c0_52], %10 {strides = array<i32>} : memref<176x4xf32, #tpu.memory_space<vmem>>, vector<16x4xf32>,
    %58 = vector.extract_strided_slice %8 {offsets = [64, 0], sizes = [8, 4], strides = [1, 1]} : vector<256x4xf32> to vector<8x4xf32>
    %c16 = arith.constant 16 : index
    %c0_53 = arith.constant 0 : index
    %59 = vector.load %arg13[%c16, %c0_53] : memref<176x4xf32, #tpu.memory_space<vmem>>, vector<8x4xf32>
    tpu.vector_store %arg13[%c16, %c0_53], %58 {strides = array<i32>} : memref<176x4xf32, #tpu.memory_space<vmem>>, vector<8x4xf32>,
    %c24 = arith.constant 24 : index
    %c0_54 = arith.constant 0 : index
    %60 = vector.load %arg13[%c24, %c0_54] : memref<176x4xf32, #tpu.memory_space<vmem>>, vector<8x4xf32>
    tpu.vector_store %arg13[%c24, %c0_54], %11 {strides = array<i32>} : memref<176x4xf32, #tpu.memory_space<vmem>>, vector<8x4xf32>,
    %61 = vector.extract_strided_slice %8 {offsets = [72, 0], sizes = [8, 4], strides = [1, 1]} : vector<256x4xf32> to vector<8x4xf32>
    %c32_55 = arith.constant 32 : index
    %c0_56 = arith.constant 0 : index
    %62 = vector.load %arg13[%c32_55, %c0_56] : memref<176x4xf32, #tpu.memory_space<vmem>>, vector<8x4xf32>
    tpu.vector_store %arg13[%c32_55, %c0_56], %61 {strides = array<i32>} : memref<176x4xf32, #tpu.memory_space<vmem>>, vector<8x4xf32>,
    %c40_57 = arith.constant 40 : index
    %c0_58 = arith.constant 0 : index
    %63 = vector.load %arg13[%c40_57, %c0_58] : memref<176x4xf32, #tpu.memory_space<vmem>>, vector<8x4xf32>
    tpu.vector_store %arg13[%c40_57, %c0_58], %11 {strides = array<i32>} : memref<176x4xf32, #tpu.memory_space<vmem>>, vector<8x4xf32>,
    %64 = vector.extract_strided_slice %8 {offsets = [80, 0], sizes = [8, 4], strides = [1, 1]} : vector<256x4xf32> to vector<8x4xf32>
    %c48_59 = arith.constant 48 : index
    %c0_60 = arith.constant 0 : index
    %65 = vector.load %arg13[%c48_59, %c0_60] : memref<176x4xf32, #tpu.memory_space<vmem>>, vector<8x4xf32>
    tpu.vector_store %arg13[%c48_59, %c0_60], %64 {strides = array<i32>} : memref<176x4xf32, #tpu.memory_space<vmem>>, vector<8x4xf32>,
    %c56_61 = arith.constant 56 : index
    %c0_62 = arith.constant 0 : index
    %66 = vector.load %arg13[%c56_61, %c0_62] : memref<176x4xf32, #tpu.memory_space<vmem>>, vector<8x4xf32>
    tpu.vector_store %arg13[%c56_61, %c0_62], %11 {strides = array<i32>} : memref<176x4xf32, #tpu.memory_space<vmem>>, vector<8x4xf32>,
    %67 = vector.extract_strided_slice %8 {offsets = [88, 0], sizes = [8, 4], strides = [1, 1]} : vector<256x4xf32> to vector<8x4xf32>
    %c64_63 = arith.constant 64 : index
    %c0_64 = arith.constant 0 : index
    %68 = vector.load %arg13[%c64_63, %c0_64] : memref<176x4xf32, #tpu.memory_space<vmem>>, vector<8x4xf32>
    tpu.vector_store %arg13[%c64_63, %c0_64], %67 {strides = array<i32>} : memref<176x4xf32, #tpu.memory_space<vmem>>, vector<8x4xf32>,
    %c72_65 = arith.constant 72 : index
    %c0_66 = arith.constant 0 : index
    %69 = vector.load %arg13[%c72_65, %c0_66] : memref<176x4xf32, #tpu.memory_space<vmem>>, vector<8x4xf32>
    tpu.vector_store %arg13[%c72_65, %c0_66], %11 {strides = array<i32>} : memref<176x4xf32, #tpu.memory_space<vmem>>, vector<8x4xf32>,
    %70 = vector.extract_strided_slice %8 {offsets = [96, 0], sizes = [8, 4], strides = [1, 1]} : vector<256x4xf32> to vector<8x4xf32>
    %c80_67 = arith.constant 80 : index
    %c0_68 = arith.constant 0 : index
    %71 = vector.load %arg13[%c80_67, %c0_68] : memref<176x4xf32, #tpu.memory_space<vmem>>, vector<8x4xf32>
    tpu.vector_store %arg13[%c80_67, %c0_68], %70 {strides = array<i32>} : memref<176x4xf32, #tpu.memory_space<vmem>>, vector<8x4xf32>,
    %c88_69 = arith.constant 88 : index
    %c0_70 = arith.constant 0 : index
    %72 = vector.load %arg13[%c88_69, %c0_70] : memref<176x4xf32, #tpu.memory_space<vmem>>, vector<8x4xf32>
    tpu.vector_store %arg13[%c88_69, %c0_70], %11 {strides = array<i32>} : memref<176x4xf32, #tpu.memory_space<vmem>>, vector<8x4xf32>,
    %73 = vector.extract_strided_slice %8 {offsets = [104, 0], sizes = [8, 4], strides = [1, 1]} : vector<256x4xf32> to vector<8x4xf32>
    %c96_71 = arith.constant 96 : index
    %c0_72 = arith.constant 0 : index
    %74 = vector.load %arg13[%c96_71, %c0_72] : memref<176x4xf32, #tpu.memory_space<vmem>>, vector<8x4xf32>
    tpu.vector_store %arg13[%c96_71, %c0_72], %73 {strides = array<i32>} : memref<176x4xf32, #tpu.memory_space<vmem>>, vector<8x4xf32>,
    %c104_73 = arith.constant 104 : index
    %c0_74 = arith.constant 0 : index
    %75 = vector.load %arg13[%c104_73, %c0_74] : memref<176x4xf32, #tpu.memory_space<vmem>>, vector<8x4xf32>
    tpu.vector_store %arg13[%c104_73, %c0_74], %11 {strides = array<i32>} : memref<176x4xf32, #tpu.memory_space<vmem>>, vector<8x4xf32>,
    %76 = vector.extract_strided_slice %8 {offsets = [112, 0], sizes = [8, 4], strides = [1, 1]} : vector<256x4xf32> to vector<8x4xf32>
    %c112_75 = arith.constant 112 : index
    %c0_76 = arith.constant 0 : index
    %77 = vector.load %arg13[%c112_75, %c0_76] : memref<176x4xf32, #tpu.memory_space<vmem>>, vector<8x4xf32>
    tpu.vector_store %arg13[%c112_75, %c0_76], %76 {strides = array<i32>} : memref<176x4xf32, #tpu.memory_space<vmem>>, vector<8x4xf32>,
    %c120_77 = arith.constant 120 : index
    %c0_78 = arith.constant 0 : index
    %78 = vector.load %arg13[%c120_77, %c0_78] : memref<176x4xf32, #tpu.memory_space<vmem>>, vector<8x4xf32>
    tpu.vector_store %arg13[%c120_77, %c0_78], %11 {strides = array<i32>} : memref<176x4xf32, #tpu.memory_space<vmem>>, vector<8x4xf32>,
    %79 = vector.extract_strided_slice %8 {offsets = [120, 0], sizes = [8, 4], strides = [1, 1]} : vector<256x4xf32> to vector<8x4xf32>
    %c128_79 = arith.constant 128 : index
    %c0_80 = arith.constant 0 : index
    %80 = vector.load %arg13[%c128_79, %c0_80] : memref<176x4xf32, #tpu.memory_space<vmem>>, vector<8x4xf32>
    tpu.vector_store %arg13[%c128_79, %c0_80], %79 {strides = array<i32>} : memref<176x4xf32, #tpu.memory_space<vmem>>, vector<8x4xf32>,
    %c136_81 = arith.constant 136 : index
    %c0_82 = arith.constant 0 : index
    %81 = vector.load %arg13[%c136_81, %c0_82] : memref<176x4xf32, #tpu.memory_space<vmem>>, vector<8x4xf32>
    tpu.vector_store %arg13[%c136_81, %c0_82], %11 {strides = array<i32>} : memref<176x4xf32, #tpu.memory_space<vmem>>, vector<8x4xf32>,
    %c0_83 = arith.constant 0 : index
    %c0_84 = arith.constant 0 : index
    %82 = vector.load %arg14[%c0_83, %c0_84] : memref<176x4xf32, #tpu.memory_space<vmem>>, vector<32x4xf32>
    tpu.vector_store %arg14[%c0_83, %c0_84], %9 {strides = array<i32>} : memref<176x4xf32, #tpu.memory_space<vmem>>, vector<32x4xf32>,
    %c144_85 = arith.constant 144 : index
    %c0_86 = arith.constant 0 : index
    %83 = vector.load %arg14[%c144_85, %c0_86] : memref<176x4xf32, #tpu.memory_space<vmem>>, vector<16x4xf32>
    tpu.vector_store %arg14[%c144_85, %c0_86], %10 {strides = array<i32>} : memref<176x4xf32, #tpu.memory_space<vmem>>, vector<16x4xf32>,
    %84 = vector.extract_strided_slice %8 {offsets = [0, 0], sizes = [8, 4], strides = [1, 1]} : vector<256x4xf32> to vector<8x4xf32>
    %c16_87 = arith.constant 16 : index
    %c0_88 = arith.constant 0 : index
    %85 = vector.load %arg14[%c16_87, %c0_88] : memref<176x4xf32, #tpu.memory_space<vmem>>, vector<8x4xf32>
    tpu.vector_store %arg14[%c16_87, %c0_88], %84 {strides = array<i32>} : memref<176x4xf32, #tpu.memory_space<vmem>>, vector<8x4xf32>,
    %86 = vector.extract_strided_slice %8 {offsets = [8, 0], sizes = [8, 4], strides = [1, 1]} : vector<256x4xf32> to vector<8x4xf32>
    %c32_89 = arith.constant 32 : index
    %c0_90 = arith.constant 0 : index
    %87 = vector.load %arg14[%c32_89, %c0_90] : memref<176x4xf32, #tpu.memory_space<vmem>>, vector<8x4xf32>
    tpu.vector_store %arg14[%c32_89, %c0_90], %86 {strides = array<i32>} : memref<176x4xf32, #tpu.memory_space<vmem>>, vector<8x4xf32>,
    %88 = vector.extract_strided_slice %8 {offsets = [16, 0], sizes = [8, 4], strides = [1, 1]} : vector<256x4xf32> to vector<8x4xf32>
    %c48_91 = arith.constant 48 : index
    %c0_92 = arith.constant 0 : index
    %89 = vector.load %arg14[%c48_91, %c0_92] : memref<176x4xf32, #tpu.memory_space<vmem>>, vector<8x4xf32>
    tpu.vector_store %arg14[%c48_91, %c0_92], %88 {strides = array<i32>} : memref<176x4xf32, #tpu.memory_space<vmem>>, vector<8x4xf32>,
    %90 = vector.extract_strided_slice %8 {offsets = [24, 0], sizes = [8, 4], strides = [1, 1]} : vector<256x4xf32> to vector<8x4xf32>
    %c64_93 = arith.constant 64 : index
    %c0_94 = arith.constant 0 : index
    %91 = vector.load %arg14[%c64_93, %c0_94] : memref<176x4xf32, #tpu.memory_space<vmem>>, vector<8x4xf32>
    tpu.vector_store %arg14[%c64_93, %c0_94], %90 {strides = array<i32>} : memref<176x4xf32, #tpu.memory_space<vmem>>, vector<8x4xf32>,
    %92 = vector.extract_strided_slice %8 {offsets = [32, 0], sizes = [8, 4], strides = [1, 1]} : vector<256x4xf32> to vector<8x4xf32>
    %c80_95 = arith.constant 80 : index
    %c0_96 = arith.constant 0 : index
    %93 = vector.load %arg14[%c80_95, %c0_96] : memref<176x4xf32, #tpu.memory_space<vmem>>, vector<8x4xf32>
    tpu.vector_store %arg14[%c80_95, %c0_96], %92 {strides = array<i32>} : memref<176x4xf32, #tpu.memory_space<vmem>>, vector<8x4xf32>,
    %94 = vector.extract_strided_slice %8 {offsets = [40, 0], sizes = [8, 4], strides = [1, 1]} : vector<256x4xf32> to vector<8x4xf32>
    %c96_97 = arith.constant 96 : index
    %c0_98 = arith.constant 0 : index
    %95 = vector.load %arg14[%c96_97, %c0_98] : memref<176x4xf32, #tpu.memory_space<vmem>>, vector<8x4xf32>
    tpu.vector_store %arg14[%c96_97, %c0_98], %94 {strides = array<i32>} : memref<176x4xf32, #tpu.memory_space<vmem>>, vector<8x4xf32>,
    %96 = vector.extract_strided_slice %8 {offsets = [48, 0], sizes = [8, 4], strides = [1, 1]} : vector<256x4xf32> to vector<8x4xf32>
    %c112_99 = arith.constant 112 : index
    %c0_100 = arith.constant 0 : index
    %97 = vector.load %arg14[%c112_99, %c0_100] : memref<176x4xf32, #tpu.memory_space<vmem>>, vector<8x4xf32>
    tpu.vector_store %arg14[%c112_99, %c0_100], %96 {strides = array<i32>} : memref<176x4xf32, #tpu.memory_space<vmem>>, vector<8x4xf32>,
    %98 = vector.extract_strided_slice %8 {offsets = [56, 0], sizes = [8, 4], strides = [1, 1]} : vector<256x4xf32> to vector<8x4xf32>
    %c128_101 = arith.constant 128 : index
    %c0_102 = arith.constant 0 : index
    %99 = vector.load %arg14[%c128_101, %c0_102] : memref<176x4xf32, #tpu.memory_space<vmem>>, vector<8x4xf32>
    tpu.vector_store %arg14[%c128_101, %c0_102], %98 {strides = array<i32>} : memref<176x4xf32, #tpu.memory_space<vmem>>, vector<8x4xf32>,
    %c15 = arith.constant 15 : index
    %c0_103 = arith.constant 0 : index
    %100 = vector.load %arg11[%c15, %c0_103] : memref<176x4xf32, #tpu.memory_space<vmem>>, vector<128x4xf32>
    %c0_104 = arith.constant 0 : index
    %c0_105 = arith.constant 0 : index
    %c0_106 = arith.constant 0 : index
    %101 = vector.load %arg4[%c0_104, %c0_105, %c0_106] : memref<9x4x4xf32, #tpu.memory_space<vmem>>, vector<1x4x4xf32>
    %102 = vector.shape_cast %101 : vector<1x4x4xf32> to vector<4x4xf32>
    %cst_107 = arith.constant dense<0.000000e+00> : vector<128x4xf32>
    %103 = tpu.matmul %100, %102, %cst_107 {dimension_numbers = #tpu.dot_dimension_numbers<[1], [0], [0], [1], [0, 0, 1, 1], [], []>} : vector<128x4xf32>, vector<4x4xf32>, vector<128x4xf32> -> vector<128x4xf32>
    %c16_108 = arith.constant 16 : index
    %c0_109 = arith.constant 0 : index
    %104 = vector.load %arg12[%c16_108, %c0_109] : memref<176x4xf32, #tpu.memory_space<vmem>>, vector<128x4xf32>
    %c1 = arith.constant 1 : index
    %c0_110 = arith.constant 0 : index
    %c0_111 = arith.constant 0 : index
    %105 = vector.load %arg4[%c1, %c0_110, %c0_111] : memref<9x4x4xf32, #tpu.memory_space<vmem>>, vector<1x4x4xf32>
    %106 = vector.shape_cast %105 : vector<1x4x4xf32> to vector<4x4xf32>
    %cst_112 = arith.constant dense<0.000000e+00> : vector<128x4xf32>
    %107 = tpu.matmul %104, %106, %cst_112 {dimension_numbers = #tpu.dot_dimension_numbers<[1], [0], [0], [1], [0, 0, 1, 1], [], []>} : vector<128x4xf32>, vector<4x4xf32>, vector<128x4xf32> -> vector<128x4xf32>
    %108 = arith.addf %103, %107 : vector<128x4xf32>
    %c16_113 = arith.constant 16 : index
    %c0_114 = arith.constant 0 : index
    %109 = vector.load %arg11[%c16_113, %c0_114] : memref<176x4xf32, #tpu.memory_space<vmem>>, vector<128x4xf32>
    %c2 = arith.constant 2 : index
    %c0_115 = arith.constant 0 : index
    %c0_116 = arith.constant 0 : index
    %110 = vector.load %arg4[%c2, %c0_115, %c0_116] : memref<9x4x4xf32, #tpu.memory_space<vmem>>, vector<1x4x4xf32>
    %111 = vector.shape_cast %110 : vector<1x4x4xf32> to vector<4x4xf32>
    %cst_117 = arith.constant dense<0.000000e+00> : vector<128x4xf32>
    %112 = tpu.matmul %109, %111, %cst_117 {dimension_numbers = #tpu.dot_dimension_numbers<[1], [0], [0], [1], [0, 0, 1, 1], [], []>} : vector<128x4xf32>, vector<4x4xf32>, vector<128x4xf32> -> vector<128x4xf32>
    %113 = arith.addf %108, %112 : vector<128x4xf32>
    %c15_118 = arith.constant 15 : index
    %c0_119 = arith.constant 0 : index
    %114 = vector.load %arg13[%c15_118, %c0_119] : memref<176x4xf32, #tpu.memory_space<vmem>>, vector<128x4xf32>
    %c3 = arith.constant 3 : index
    %c0_120 = arith.constant 0 : index
    %c0_121 = arith.constant 0 : index
    %115 = vector.load %arg4[%c3, %c0_120, %c0_121] : memref<9x4x4xf32, #tpu.memory_space<vmem>>, vector<1x4x4xf32>
    %116 = vector.shape_cast %115 : vector<1x4x4xf32> to vector<4x4xf32>
    %cst_122 = arith.constant dense<0.000000e+00> : vector<128x4xf32>
    %117 = tpu.matmul %114, %116, %cst_122 {dimension_numbers = #tpu.dot_dimension_numbers<[1], [0], [0], [1], [0, 0, 1, 1], [], []>} : vector<128x4xf32>, vector<4x4xf32>, vector<128x4xf32> -> vector<128x4xf32>
    %118 = arith.addf %113, %117 : vector<128x4xf32>
    %c16_123 = arith.constant 16 : index
    %c0_124 = arith.constant 0 : index
    %119 = vector.load %arg14[%c16_123, %c0_124] : memref<176x4xf32, #tpu.memory_space<vmem>>, vector<128x4xf32>
    %c4 = arith.constant 4 : index
    %c0_125 = arith.constant 0 : index
    %c0_126 = arith.constant 0 : index
    %120 = vector.load %arg4[%c4, %c0_125, %c0_126] : memref<9x4x4xf32, #tpu.memory_space<vmem>>, vector<1x4x4xf32>
    %121 = vector.shape_cast %120 : vector<1x4x4xf32> to vector<4x4xf32>
    %cst_127 = arith.constant dense<0.000000e+00> : vector<128x4xf32>
    %122 = tpu.matmul %119, %121, %cst_127 {dimension_numbers = #tpu.dot_dimension_numbers<[1], [0], [0], [1], [0, 0, 1, 1], [], []>} : vector<128x4xf32>, vector<4x4xf32>, vector<128x4xf32> -> vector<128x4xf32>
    %123 = arith.addf %118, %122 : vector<128x4xf32>
    %c16_128 = arith.constant 16 : index
    %c0_129 = arith.constant 0 : index
    %124 = vector.load %arg13[%c16_128, %c0_129] : memref<176x4xf32, #tpu.memory_space<vmem>>, vector<128x4xf32>
    %c5 = arith.constant 5 : index
    %c0_130 = arith.constant 0 : index
    %c0_131 = arith.constant 0 : index
    %125 = vector.load %arg4[%c5, %c0_130, %c0_131] : memref<9x4x4xf32, #tpu.memory_space<vmem>>, vector<1x4x4xf32>
    %126 = vector.shape_cast %125 : vector<1x4x4xf32> to vector<4x4xf32>
    %cst_132 = arith.constant dense<0.000000e+00> : vector<128x4xf32>
    %127 = tpu.matmul %124, %126, %cst_132 {dimension_numbers = #tpu.dot_dimension_numbers<[1], [0], [0], [1], [0, 0, 1, 1], [], []>} : vector<128x4xf32>, vector<4x4xf32>, vector<128x4xf32> -> vector<128x4xf32>
    %128 = arith.addf %123, %127 : vector<128x4xf32>
    %c31 = arith.constant 31 : index
    %c0_133 = arith.constant 0 : index
    %129 = vector.load %arg11[%c31, %c0_133] : memref<176x4xf32, #tpu.memory_space<vmem>>, vector<128x4xf32>
    %c6 = arith.constant 6 : index
    %c0_134 = arith.constant 0 : index
    %c0_135 = arith.constant 0 : index
    %130 = vector.load %arg4[%c6, %c0_134, %c0_135] : memref<9x4x4xf32, #tpu.memory_space<vmem>>, vector<1x4x4xf32>
    %131 = vector.shape_cast %130 : vector<1x4x4xf32> to vector<4x4xf32>
    %cst_136 = arith.constant dense<0.000000e+00> : vector<128x4xf32>
    %132 = tpu.matmul %129, %131, %cst_136 {dimension_numbers = #tpu.dot_dimension_numbers<[1], [0], [0], [1], [0, 0, 1, 1], [], []>} : vector<128x4xf32>, vector<4x4xf32>, vector<128x4xf32> -> vector<128x4xf32>
    %133 = arith.addf %128, %132 : vector<128x4xf32>
    %c32_137 = arith.constant 32 : index
    %c0_138 = arith.constant 0 : index
    %134 = vector.load %arg12[%c32_137, %c0_138] : memref<176x4xf32, #tpu.memory_space<vmem>>, vector<128x4xf32>
    %c7 = arith.constant 7 : index
    %c0_139 = arith.constant 0 : index
    %c0_140 = arith.constant 0 : index
    %135 = vector.load %arg4[%c7, %c0_139, %c0_140] : memref<9x4x4xf32, #tpu.memory_space<vmem>>, vector<1x4x4xf32>
    %136 = vector.shape_cast %135 : vector<1x4x4xf32> to vector<4x4xf32>
    %cst_141 = arith.constant dense<0.000000e+00> : vector<128x4xf32>
    %137 = tpu.matmul %134, %136, %cst_141 {dimension_numbers = #tpu.dot_dimension_numbers<[1], [0], [0], [1], [0, 0, 1, 1], [], []>} : vector<128x4xf32>, vector<4x4xf32>, vector<128x4xf32> -> vector<128x4xf32>
    %138 = arith.addf %133, %137 : vector<128x4xf32>
    %c32_142 = arith.constant 32 : index
    %c0_143 = arith.constant 0 : index
    %139 = vector.load %arg11[%c32_142, %c0_143] : memref<176x4xf32, #tpu.memory_space<vmem>>, vector<128x4xf32>
    %c8 = arith.constant 8 : index
    %c0_144 = arith.constant 0 : index
    %c0_145 = arith.constant 0 : index
    %140 = vector.load %arg4[%c8, %c0_144, %c0_145] : memref<9x4x4xf32, #tpu.memory_space<vmem>>, vector<1x4x4xf32>
    %141 = vector.shape_cast %140 : vector<1x4x4xf32> to vector<4x4xf32>
    %cst_146 = arith.constant dense<0.000000e+00> : vector<128x4xf32>
    %142 = tpu.matmul %139, %141, %cst_146 {dimension_numbers = #tpu.dot_dimension_numbers<[1], [0], [0], [1], [0, 0, 1, 1], [], []>} : vector<128x4xf32>, vector<4x4xf32>, vector<128x4xf32> -> vector<128x4xf32>
    %143 = arith.addf %138, %142 : vector<128x4xf32>
    %144 = vector.shape_cast %143 : vector<128x4xf32> to vector<8x16x4xf32>
    %145 = vector.extract_strided_slice %144 {offsets = [0, 0, 0], sizes = [8, 8, 4], strides = [1, 1, 1]} : vector<8x16x4xf32> to vector<8x8x4xf32>
    %146 = vector.shape_cast %145 : vector<8x8x4xf32> to vector<64x4xf32>
    %c0_147 = arith.constant 0 : index
    %c0_148 = arith.constant 0 : index
    %147 = vector.load %arg5[%c0_147, %c0_148] : memref<1x4xf32, #tpu.memory_space<vmem>>, vector<1x4xf32>
    %148 = vector.broadcast %147 : vector<1x4xf32> to vector<64x4xf32>
    %149 = arith.addf %146, %148 : vector<64x4xf32>
    %cst_149 = arith.constant 0.000000e+00 : f32
    %150 = vector.broadcast %cst_149 : f32 to vector<64x4xf32>
    %151 = arith.maximumf %149, %150 : vector<64x4xf32>
    %c0_150 = arith.constant 0 : index
    %c0_151 = arith.constant 0 : index
    %152 = vector.load %arg6[%c0_150, %c0_151] : memref<4x16xf32, #tpu.memory_space<vmem>>, vector<4x16xf32>
    %cst_152 = arith.constant dense<0.000000e+00> : vector<64x16xf32>
    %153 = tpu.matmul %151, %152, %cst_152 {dimension_numbers = #tpu.dot_dimension_numbers<[1], [0], [0], [1], [0, 0, 1, 1], [], []>} : vector<64x4xf32>, vector<4x16xf32>, vector<64x16xf32> -> vector<64x16xf32>
    %c0_153 = arith.constant 0 : index
    %c0_154 = arith.constant 0 : index
    %154 = vector.load %arg7[%c0_153, %c0_154] : memref<1x16xf32, #tpu.memory_space<vmem>>, vector<1x16xf32>
    %155 = vector.broadcast %154 : vector<1x16xf32> to vector<64x16xf32>
    %156 = arith.addf %153, %155 : vector<64x16xf32>
    %157 = vector.extract_strided_slice %1 {offsets = [0, 0], sizes = [64, 8], strides = [1, 1]} : vector<256x8xf32> to vector<64x8xf32>
    %c0_155 = arith.constant 0 : index
    %c0_156 = arith.constant 0 : index
    %158 = vector.load %arg8[%c0_155, %c0_156] : memref<8x16xf32, #tpu.memory_space<vmem>>, vector<8x16xf32>
    %cst_157 = arith.constant dense<0.000000e+00> : vector<64x16xf32>
    %159 = tpu.matmul %157, %158, %cst_157 {dimension_numbers = #tpu.dot_dimension_numbers<[1], [0], [0], [1], [0, 0, 1, 1], [], []>} : vector<64x8xf32>, vector<8x16xf32>, vector<64x16xf32> -> vector<64x16xf32>
    %c0_158 = arith.constant 0 : index
    %c0_159 = arith.constant 0 : index
    %160 = vector.load %arg9[%c0_158, %c0_159] : memref<1x16xf32, #tpu.memory_space<vmem>>, vector<1x16xf32>
    %161 = vector.broadcast %160 : vector<1x16xf32> to vector<64x16xf32>
    %162 = arith.addf %159, %161 : vector<64x16xf32>
    %163 = arith.addf %156, %162 : vector<64x16xf32>
    %cst_160 = arith.constant 0.000000e+00 : f32
    %164 = vector.broadcast %cst_160 : f32 to vector<64x16xf32>
    %165 = arith.maximumf %163, %164 : vector<64x16xf32>
    %c0_161 = arith.constant 0 : index
    %c0_162 = arith.constant 0 : index
    %c0_163 = arith.constant 0 : index
    %166 = vector.load %arg10[%c0_161, %c0_162, %c0_163] : memref<1x64x16xf32, #tpu.memory_space<vmem>>, vector<1x64x16xf32>
    %167 = vector.shape_cast %166 : vector<1x64x16xf32> to vector<64x16xf32>
    %168 = vector.shape_cast %165 : vector<64x16xf32> to vector<1x64x16xf32>
    tpu.vector_store %arg10[%c0_161, %c0_162, %c0_163], %168 {strides = array<i32>} : memref<1x64x16xf32, #tpu.memory_space<vmem>>, vector<1x64x16xf32>,
    return
  }
  func.func @transform_0(%arg0: i32) -> (i32, i32, i32) {
    %c0_i32 = arith.constant 0 : i32
    %c0_i32_0 = arith.constant 0 : i32
    %c0_i32_1 = arith.constant 0 : i32
    return %arg0, %c0_i32, %c0_i32_0 : i32, i32, i32
  }
  func.func @transform_1(%arg0: i32) -> (i32, i32) {
    %c0_i32 = arith.constant 0 : i32
    %c0_i32_0 = arith.constant 0 : i32
    %c0_i32_1 = arith.constant 0 : i32
    return %c0_i32, %c0_i32_0 : i32, i32
  }
  func.func @transform_2(%arg0: i32) -> (i32, i32) {
    %c0_i32 = arith.constant 0 : i32
    %c0_i32_0 = arith.constant 0 : i32
    %c0_i32_1 = arith.constant 0 : i32
    return %c0_i32, %c0_i32_0 : i32, i32
  }
  func.func @transform_3(%arg0: i32) -> (i32, i32, i32) {
    %c0_i32 = arith.constant 0 : i32
    %c0_i32_0 = arith.constant 0 : i32
    %c0_i32_1 = arith.constant 0 : i32
    %c0_i32_2 = arith.constant 0 : i32
    return %c0_i32, %c0_i32_0, %c0_i32_1 : i32, i32, i32
  }
  func.func @transform_4(%arg0: i32) -> (i32, i32) {
    %c0_i32 = arith.constant 0 : i32
    %c0_i32_0 = arith.constant 0 : i32
    %c0_i32_1 = arith.constant 0 : i32
    return %c0_i32, %c0_i32_0 : i32, i32
  }
  func.func @transform_5(%arg0: i32) -> (i32, i32) {
    %c0_i32 = arith.constant 0 : i32
    %c0_i32_0 = arith.constant 0 : i32
    %c0_i32_1 = arith.constant 0 : i32
    return %c0_i32, %c0_i32_0 : i32, i32
  }
  func.func @transform_6(%arg0: i32) -> (i32, i32) {
    %c0_i32 = arith.constant 0 : i32
    %c0_i32_0 = arith.constant 0 : i32
    %c0_i32_1 = arith.constant 0 : i32
    return %c0_i32, %c0_i32_0 : i32, i32
  }
  func.func @transform_7(%arg0: i32) -> (i32, i32) {
    %c0_i32 = arith.constant 0 : i32
    %c0_i32_0 = arith.constant 0 : i32
    %c0_i32_1 = arith.constant 0 : i32
    return %c0_i32, %c0_i32_0 : i32, i32
  }
  func.func @transform_8(%arg0: i32) -> (i32, i32) {
    %c0_i32 = arith.constant 0 : i32
    %c0_i32_0 = arith.constant 0 : i32
    %c0_i32_1 = arith.constant 0 : i32
    return %c0_i32, %c0_i32_0 : i32, i32
  }
  func.func @transform_9(%arg0: i32) -> (i32, i32, i32) {
    %c0_i32 = arith.constant 0 : i32
    %c0_i32_0 = arith.constant 0 : i32
    %c0_i32_1 = arith.constant 0 : i32
    return %arg0, %c0_i32, %c0_i32_0 : i32, i32, i32
  }
}

</mosaic_0001>

<llo_original>
// kernel: bottleneck_forward.1
$region0: #{bottleneck_forward.1}
  #allocation0 [shape = 'u32[]', space=smem, size = 0x4, offset = 0x4, fixed_abs, tag = 'smem constant byte address 0x4 - core index']
  #allocation1 [shape = 'u32[72,128]{1,0:T(1,128)}', space=vmem, size = 0x9000, scoped, tag = 'internal scratch']
  #allocation2 [shape = 'f32[176,4]{1,0:T(8,128)}', space=vmem, size = 0x16000, scoped, tag = 'scratch operand']
  #allocation3 [shape = 'f32[176,4]{1,0:T(8,128)}', space=vmem, size = 0x16000, scoped, tag = 'scratch operand']
  #allocation4 [shape = 'f32[176,4]{1,0:T(8,128)}', space=vmem, size = 0x16000, scoped, tag = 'scratch operand']
  #allocation5 [shape = 'f32[176,4]{1,0:T(8,128)}', space=vmem, size = 0x16000, scoped, tag = 'scratch operand']
  %s0 = inlined_call_operand.vmem [shape: f32[2,256,8], index: 0, kind: input, shape index: {}]
  %s1 = inlined_call_operand.vmem [shape: f32[8,4], index: 1, kind: input, shape index: {}]
  %s2 = inlined_call_operand.vmem [shape: f32[1,4], index: 2, kind: input, shape index: {}]
  %s3 = inlined_call_operand.vmem [shape: f32[9,4,4], index: 3, kind: input, shape index: {}]
  %s4 = inlined_call_operand.vmem [shape: f32[1,4], index: 4, kind: input, shape index: {}]
  %s5 = inlined_call_operand.vmem [shape: f32[4,16], index: 5, kind: input, shape index: {}]
  %s6 = inlined_call_operand.vmem [shape: f32[1,16], index: 6, kind: input, shape index: {}]
  %s7 = inlined_call_operand.vmem [shape: f32[8,16], index: 7, kind: input, shape index: {}]
  %s8 = inlined_call_operand.vmem [shape: f32[1,16], index: 8, kind: input, shape index: {}]
  %s9 = inlined_call_operand.hbm [shape: f32[2,64,16], index: 9, kind: output, shape index: {}]
  %s10 = sld [smem:[#allocation0]]
  $region69: #{bottleneck_forward.1} parent=0
    _
  %s12 = ssub.s32 1, %s10
  %s13 = scalar_select 0, %s12, %s10
  $region1: #{bottleneck_forward.1} parent=0
    #allocation6 [shape = 'u8[65536]{0}', space=vmem, size = 0x10000, scoped, tag = 'output window, operand 0']
    #allocation7 [shape = 's32[2]{0}', space=sflag, size = 0x8, scoped, tag = 'scoped memory for bottleneck_forward.1']
    %14 = vsyncpa [#allocation7], 0
    %s15 = scalar_lea.sflag [#allocation7], 1
    %16 = vsyncpa %s15, 0
    loop: start=0, step=1, limit=4
    $region2: #{bottleneck_forward.1} parent=1 // loop_pre_header
      _
    $region3: #{bottleneck_forward.1} parent=1 // loop_header
      %s18 = sphi 0, %s22
      %p19 = scmp.ge.s32.totalorder %s18, 4
      %s28 = sphi 0, %s30
      %s31 = sphi 0, %s28
      %s32 = sphi 0, %s31
      %s48 = sphi 0, %s32
      %s52 = sphi 0, %s52
      %s54 = sphi 0, %s52
      %s55 = sphi 0, %s54
      %s69 = sphi 0, %s55
      %s73 = sphi 0, %s73
      %s75 = sphi 0, %s73
      %s76 = sphi 0, %s75
      %s90 = sphi 0, %s76
      %s94 = sphi 0, %s94
      %s96 = sphi 0, %s94
      %s97 = sphi 0, %s96
      %s111 = sphi 0, %s97
      %s115 = sphi 0, %s115
      %s117 = sphi 0, %s115
      %s118 = sphi 0, %s117
      %s132 = sphi 0, %s118
      %s136 = sphi 0, %s136
      %s138 = sphi 0, %s136
      %s139 = sphi 0, %s138
      %s153 = sphi 0, %s139
      %s157 = sphi 0, %s157
      %s159 = sphi 0, %s157
      %s160 = sphi 0, %s159
      %s174 = sphi 0, %s160
      %s178 = sphi 0, %s178
      %s180 = sphi 0, %s178
      %s181 = sphi 0, %s180
      %s195 = sphi 0, %s181
      %s199 = sphi 0, %s199
      %s201 = sphi 0, %s199
      %s202 = sphi 0, %s201
      %s216 = sphi 0, %s202
      %s222 = sphi 0, %s224
      %s225 = sphi 0, %s222
      %s226 = sphi 0, %s225
      %s242 = sphi 0, %s226
    $region4: #{bottleneck_forward.1} parent=1 // loop_header_branch
      %21 = sbr.rel (%p19) target = $region8
    $region5: #{bottleneck_forward.1} parent=1 // loop_body
      %s23 = ssub.s32 %s18, 1
      %s24 = ssub.s32 %s18, 2
      %s25 = sadd.s32 %s18, 1
      %s26 = ssub.s32 %s18, %s25
      %p27 = scmp.eq.s32.totalorder %s26, 0
      %s29 = sadd.s32 %s28, 1
      %s30 = scalar_select %p27, %s28, %s29
      %p33 = pneg %p27
      %p34 = scmp.eq.s32.totalorder %s18, 1
      %p35 = por %p33, %p34
      %p36 = scmp.ne.s32.totalorder %s28, %s31
      %p37 = scmp.eq.s32.totalorder %s18, 0
      %p38 = por %p36, %p37
      %p39 = scmp.ne.s32.totalorder %s28, %s31
      %p40 = scmp.eq.s32.totalorder %s23, 1
      %p41 = por %p39, %p40
      %p42 = scmp.ne.s32.totalorder %s31, %s32
      %p43 = scmp.eq.s32.totalorder %s23, 0
      %p44 = por %p42, %p43
      %p45 = scmp.ne.s32.totalorder %s31, %s32
      %p46 = scmp.eq.s32.totalorder %s24, 1
      %p47 = por %p45, %p46
      %p49 = scmp.ne.s32.totalorder %s32, %s48
      %p50 = scmp.eq.s32.totalorder %s24, 0
      %p51 = por %p49, %p50
      %s53 = sadd.s32 %s52, 1
      %p56 = scmp.eq.s32.totalorder %s18, 1
      %p57 = scmp.ne.s32.totalorder %s52, %s54
      %p58 = scmp.eq.s32.totalorder %s18, 0
      %p59 = por %p57, %p58
      %p60 = scmp.ne.s32.totalorder %s52, %s54
      %p61 = scmp.eq.s32.totalorder %s23, 1
      %p62 = por %p60, %p61
      %p63 = scmp.ne.s32.totalorder %s54, %s55
      %p64 = scmp.eq.s32.totalorder %s23, 0
      %p65 = por %p63, %p64
      %p66 = scmp.ne.s32.totalorder %s54, %s55
      %p67 = scmp.eq.s32.totalorder %s24, 1
      %p68 = por %p66, %p67
      %p70 = scmp.ne.s32.totalorder %s55, %s69
      %p71 = scmp.eq.s32.totalorder %s24, 0
      %p72 = por %p70, %p71
      %s74 = sadd.s32 %s73, 1
      %p77 = scmp.eq.s32.totalorder %s18, 1
      %p78 = scmp.ne.s32.totalorder %s73, %s75
      %p79 = scmp.eq.s32.totalorder %s18, 0
      %p80 = por %p78, %p79
      %p81 = scmp.ne.s32.totalorder %s73, %s75
      %p82 = scmp.eq.s32.totalorder %s23, 1
      %p83 = por %p81, %p82
      %p84 = scmp.ne.s32.totalorder %s75, %s76
      %p85 = scmp.eq.s32.totalorder %s23, 0
      %p86 = por %p84, %p85
      %p87 = scmp.ne.s32.totalorder %s75, %s76
      %p88 = scmp.eq.s32.totalorder %s24, 1
      %p89 = por %p87, %p88
      %p91 = scmp.ne.s32.totalorder %s76, %s90
      %p92 = scmp.eq.s32.totalorder %s24, 0
      %p93 = por %p91, %p92
      %s95 = sadd.s32 %s94, 1
      %p98 = scmp.eq.s32.totalorder %s18, 1
      %p99 = scmp.ne.s32.totalorder %s94, %s96
      %p100 = scmp.eq.s32.totalorder %s18, 0
      %p101 = por %p99, %p100
      %p102 = scmp.ne.s32.totalorder %s94, %s96
      %p103 = scmp.eq.s32.totalorder %s23, 1
      %p104 = por %p102, %p103
      %p105 = scmp.ne.s32.totalorder %s96, %s97
      %p106 = scmp.eq.s32.totalorder %s23, 0
      %p107 = por %p105, %p106
      %p108 = scmp.ne.s32.totalorder %s96, %s97
      %p109 = scmp.eq.s32.totalorder %s24, 1
      %p110 = por %p108, %p109
      %p112 = scmp.ne.s32.totalorder %s97, %s111
      %p113 = scmp.eq.s32.totalorder %s24, 0
      %p114 = por %p112, %p113
      %s116 = sadd.s32 %s115, 1
      %p119 = scmp.eq.s32.totalorder %s18, 1
      %p120 = scmp.ne.s32.totalorder %s115, %s117
      %p121 = scmp.eq.s32.totalorder %s18, 0
      %p122 = por %p120, %p121
      %p123 = scmp.ne.s32.totalorder %s115, %s117
      %p124 = scmp.eq.s32.totalorder %s23, 1
      %p125 = por %p123, %p124
      %p126 = scmp.ne.s32.totalorder %s117, %s118
      %p127 = scmp.eq.s32.totalorder %s23, 0
      %p128 = por %p126, %p127
      %p129 = scmp.ne.s32.totalorder %s117, %s118
      %p130 = scmp.eq.s32.totalorder %s24, 1
      %p131 = por %p129, %p130
      %p133 = scmp.ne.s32.totalorder %s118, %s132
      %p134 = scmp.eq.s32.totalorder %s24, 0
      %p135 = por %p133, %p134
      %s137 = sadd.s32 %s136, 1
      %p140 = scmp.eq.s32.totalorder %s18, 1
      %p141 = scmp.ne.s32.totalorder %s136, %s138
      %p142 = scmp.eq.s32.totalorder %s18, 0
      %p143 = por %p141, %p142
      %p144 = scmp.ne.s32.totalorder %s136, %s138
      %p145 = scmp.eq.s32.totalorder %s23, 1
      %p146 = por %p144, %p145
      %p147 = scmp.ne.s32.totalorder %s138, %s139
      %p148 = scmp.eq.s32.totalorder %s23, 0
      %p149 = por %p147, %p148
      %p150 = scmp.ne.s32.totalorder %s138, %s139
      %p151 = scmp.eq.s32.totalorder %s24, 1
      %p152 = por %p150, %p151
      %p154 = scmp.ne.s32.totalorder %s139, %s153
      %p155 = scmp.eq.s32.totalorder %s24, 0
      %p156 = por %p154, %p155
      %s158 = sadd.s32 %s157, 1
      %p161 = scmp.eq.s32.totalorder %s18, 1
      %p162 = scmp.ne.s32.totalorder %s157, %s159
      %p163 = scmp.eq.s32.totalorder %s18, 0
      %p164 = por %p162, %p163
      %p165 = scmp.ne.s32.totalorder %s157, %s159
      %p166 = scmp.eq.s32.totalorder %s23, 1
      %p167 = por %p165, %p166
      %p168 = scmp.ne.s32.totalorder %s159, %s160
      %p169 = scmp.eq.s32.totalorder %s23, 0
      %p170 = por %p168, %p169
      %p171 = scmp.ne.s32.totalorder %s159, %s160
      %p172 = scmp.eq.s32.totalorder %s24, 1
      %p173 = por %p171, %p172
      %p175 = scmp.ne.s32.totalorder %s160, %s174
      %p176 = scmp.eq.s32.totalorder %s24, 0
      %p177 = por %p175, %p176
      %s179 = sadd.s32 %s178, 1
      %p182 = scmp.eq.s32.totalorder %s18, 1
      %p183 = scmp.ne.s32.totalorder %s178, %s180
      %p184 = scmp.eq.s32.totalorder %s18, 0
      %p185 = por %p183, %p184
      %p186 = scmp.ne.s32.totalorder %s178, %s180
      %p187 = scmp.eq.s32.totalorder %s23, 1
      %p188 = por %p186, %p187
      %p189 = scmp.ne.s32.totalorder %s180, %s181
      %p190 = scmp.eq.s32.totalorder %s23, 0
      %p191 = por %p189, %p190
      %p192 = scmp.ne.s32.totalorder %s180, %s181
      %p193 = scmp.eq.s32.totalorder %s24, 1
      %p194 = por %p192, %p193
      %p196 = scmp.ne.s32.totalorder %s181, %s195
      %p197 = scmp.eq.s32.totalorder %s24, 0
      %p198 = por %p196, %p197
      %s200 = sadd.s32 %s199, 1
      %p203 = scmp.eq.s32.totalorder %s18, 1
      %p204 = scmp.ne.s32.totalorder %s199, %s201
      %p205 = scmp.eq.s32.totalorder %s18, 0
      %p206 = por %p204, %p205
      %p207 = scmp.ne.s32.totalorder %s199, %s201
      %p208 = scmp.eq.s32.totalorder %s23, 1
      %p209 = por %p207, %p208
      %p210 = scmp.ne.s32.totalorder %s201, %s202
      %p211 = scmp.eq.s32.totalorder %s23, 0
      %p212 = por %p210, %p211
      %p213 = scmp.ne.s32.totalorder %s201, %s202
      %p214 = scmp.eq.s32.totalorder %s24, 1
      %p215 = por %p213, %p214
      %p217 = scmp.ne.s32.totalorder %s202, %s216
      %p218 = scmp.eq.s32.totalorder %s24, 0
      %p219 = por %p217, %p218
      %s220 = ssub.s32 %s18, %s25
      %p221 = scmp.eq.s32.totalorder %s220, 0
      %s223 = sadd.s32 %s222, 1
      %s224 = scalar_select %p221, %s222, %s223
      %p227 = pneg %p221
      %p228 = scmp.eq.s32.totalorder %s18, 1
      %p229 = por %p227, %p228
      %p230 = scmp.ne.s32.totalorder %s222, %s225
      %p231 = scmp.eq.s32.totalorder %s18, 0
      %p232 = por %p230, %p231
      %p233 = scmp.ne.s32.totalorder %s222, %s225
      %p234 = scmp.eq.s32.totalorder %s23, 1
      %p235 = por %p233, %p234
      %p236 = scmp.ne.s32.totalorder %s225, %s226
      %p237 = scmp.eq.s32.totalorder %s23, 0
      %p238 = por %p236, %p237
      %p239 = scmp.ne.s32.totalorder %s225, %s226
      %p240 = scmp.eq.s32.totalorder %s24, 1
      %p241 = por %p239, %p240
      %p243 = scmp.ne.s32.totalorder %s226, %s242
      %p244 = scmp.eq.s32.totalorder %s24, 0
      %p245 = por %p243, %p244
      %p246 = scmp.le.s32.totalorder 1, %s18
      %p247 = scmp.lt.s32.totalorder %s18, 3
      %p248 = pnand %p246, %p247
      %p249 = pneg %p248
      // Predicated region
      $region9: #{bottleneck_forward.1} parent=5 // pred_check
        _
      $region10: #{bottleneck_forward.1} parent=5 // pred_check_branch
        %251 = sbr.rel (%p248) target = $region12
      $region11: #{bottleneck_forward.1} parent=5 // pred_region
        %s252 = ssub.s32 %s18, 1
        // Predicated region
        $region13: #{bottleneck_forward.1} parent=11 // pred_check
          %p253 = pneg %p65
        $region14: #{bottleneck_forward.1} parent=11 // pred_check_branch
          %255 = sbr.rel (%p253) target = $region16
        $region15: #{bottleneck_forward.1} parent=11 // pred_region
          _
        $region16: #{bottleneck_forward.1} parent=11 // pred_fallthru
          _
        // Predicated region
        $region17: #{bottleneck_forward.1} parent=11 // pred_check
          %p256 = pneg %p86
        $region18: #{bottleneck_forward.1} parent=11 // pred_check_branch
          %258 = sbr.rel (%p256) target = $region20
        $region19: #{bottleneck_forward.1} parent=11 // pred_region
          _
        $region20: #{bottleneck_forward.1} parent=11 // pred_fallthru
          _
        // Predicated region
        $region21: #{bottleneck_forward.1} parent=11 // pred_check
          %p259 = pneg %p107
        $region22: #{bottleneck_forward.1} parent=11 // pred_check_branch
          %261 = sbr.rel (%p259) target = $region24
        $region23: #{bottleneck_forward.1} parent=11 // pred_region
          _
        $region24: #{bottleneck_forward.1} parent=11 // pred_fallthru
          _
        // Predicated region
        $region25: #{bottleneck_forward.1} parent=11 // pred_check
          %p262 = pneg %p128
        $region26: #{bottleneck_forward.1} parent=11 // pred_check_branch
          %264 = sbr.rel (%p262) target = $region28
        $region27: #{bottleneck_forward.1} parent=11 // pred_region
          _
        $region28: #{bottleneck_forward.1} parent=11 // pred_fallthru
          _
        // Predicated region
        $region29: #{bottleneck_forward.1} parent=11 // pred_check
          %p265 = pneg %p149
        $region30: #{bottleneck_forward.1} parent=11 // pred_check_branch
          %267 = sbr.rel (%p265) target = $region32
        $region31: #{bottleneck_forward.1} parent=11 // pred_region
          _
        $region32: #{bottleneck_forward.1} parent=11 // pred_fallthru
          _
        // Predicated region
        $region33: #{bottleneck_forward.1} parent=11 // pred_check
          %p268 = pneg %p170
        $region34: #{bottleneck_forward.1} parent=11 // pred_check_branch
          %270 = sbr.rel (%p268) target = $region36
        $region35: #{bottleneck_forward.1} parent=11 // pred_region
          _
        $region36: #{bottleneck_forward.1} parent=11 // pred_fallthru
          _
        // Predicated region
        $region37: #{bottleneck_forward.1} parent=11 // pred_check
          %p271 = pneg %p191
        $region38: #{bottleneck_forward.1} parent=11 // pred_check_branch
          %273 = sbr.rel (%p271) target = $region40
        $region39: #{bottleneck_forward.1} parent=11 // pred_region
          _
        $region40: #{bottleneck_forward.1} parent=11 // pred_fallthru
          _
        // Predicated region
        $region41: #{bottleneck_forward.1} parent=11 // pred_check
          %p274 = pneg %p212
        $region42: #{bottleneck_forward.1} parent=11 // pred_check_branch
          %276 = sbr.rel (%p274) target = $region44
        $region43: #{bottleneck_forward.1} parent=11 // pred_region
          _
        $region44: #{bottleneck_forward.1} parent=11 // pred_fallthru
          _
      $region12: #{bottleneck_forward.1} parent=5 // pred_fallthru
        _
      %p277 = scmp.lt.s32.totalorder %s18, 2
      // Predicated region
      $region45: #{bottleneck_forward.1} parent=5 // pred_check
        %p278 = pneg %p277
      $region46: #{bottleneck_forward.1} parent=5 // pred_check_branch
        %280 = sbr.rel (%p278) target = $region48
      $region47: #{bottleneck_forward.1} parent=5 // pred_region
        // Predicated region
        $region49: #{bottleneck_forward.1} parent=47 // pred_check
          %p281 = pneg %p38
        $region50: #{bottleneck_forward.1} parent=47 // pred_check_branch
          %283 = sbr.rel (%p281) target = $region52
        $region51: #{bottleneck_forward.1} parent=47 // pred_region
          %p284 = scmp.lt.s32.totalorder %s18, 1
          %s285 = scalar_select %p284, %s18, 1
          %s286 = smul.addr %s285, 32
          %s287 = smul.addr %s286, 8
          %s288 = scalar_lea.vmem %s0, %s287
        $region52: #{bottleneck_forward.1} parent=47 // pred_fallthru
          _
      $region48: #{bottleneck_forward.1} parent=5 // pred_fallthru
        _
      %p289 = scmp.le.s32.totalorder 1, %s18
      %p290 = scmp.lt.s32.totalorder %s18, 3
      %p291 = pnand %p289, %p290
      %p292 = pneg %p291
      // Predicated region
      $region53: #{bottleneck_forward.1} parent=5 // pred_check
        _
      $region54: #{bottleneck_forward.1} parent=5 // pred_check_branch
        %294 = sbr.rel (%p291) target = $region56
      $region55: #{bottleneck_forward.1} parent=5 // pred_region
        %s295 = ssub.s32 %s18, 1
        %p296 = scmp.lt.s32.totalorder %s23, 1
        %s297 = scalar_select %p296, %s23, 1
        %s298 = smul.addr %s297, 32
        %s299 = smul.addr %s298, 8
        %s300 = scalar_lea.vmem %s0, %s299
        %p301 = pneg %p44
        %p302 = pneg %p41
        %p303 = pneg %p65
        %p304 = pneg %p62
        %p305 = pneg %p86
        %p306 = pneg %p83
        %p307 = pneg %p107
        %p308 = pneg %p104
        %p309 = pneg %p128
        %p310 = pneg %p125
        %p311 = pneg %p149
        %p312 = pneg %p146
        %p313 = pneg %p170
        %p314 = pneg %p167
        %p315 = pneg %p191
        %p316 = pneg %p188
        %p317 = pneg %p212
        %p318 = pneg %p209
        %p319 = pneg %p238
        %p320 = pneg %p235
        %s321 = sand.u32 %s225, 1
        %s322 = scalar_lea.sflag [#allocation7], %s321
        %s323 = sand.u32 %s225, 1
        %s324 = smul.addr %s323, 64
        %s325 = scalar_lea.vmem [#allocation6], %s324
        %p326 = scmp.lt.s32.totalorder %s23, 1
        %s327 = scalar_select %p326, %s23, 1
        %s328 = smul.addr %s327, 32
        %s329 = smul.addr %s328, 8
        %s330 = scalar_lea.vmem %s0, %s329
        %v331 = vld [vmem:[%s330] sm:$0xff]
        %v332 = vld [vmem:[%s330 + $0x8] sm:$0xff]
        %v333 = vld [vmem:[%s330 + $0x10] sm:$0xff]
        %v334 = vld [vmem:[%s330 + $0x18] sm:$0xff]
        %v335 = vld [vmem:[%s330 + $0x20] sm:$0xff]
        %v336 = vld [vmem:[%s330 + $0x28] sm:$0xff]
        %v337 = vld [vmem:[%s330 + $0x30] sm:$0xff]
        %v338 = vld [vmem:[%s330 + $0x38] sm:$0xff]
        %v339 = vld [vmem:[%s330 + $0x40] sm:$0xff]
        %v340 = vld [vmem:[%s330 + $0x48] sm:$0xff]
        %v341 = vld [vmem:[%s330 + $0x50] sm:$0xff]
        %v342 = vld [vmem:[%s330 + $0x58] sm:$0xff]
        %v343 = vld [vmem:[%s330 + $0x60] sm:$0xff]
        %v344 = vld [vmem:[%s330 + $0x68] sm:$0xff]
        %v345 = vld [vmem:[%s330 + $0x70] sm:$0xff]
        %v346 = vld [vmem:[%s330 + $0x78] sm:$0xff]
        %v347 = vld [vmem:[%s330 + $0x80] sm:$0xff]
        %v348 = vld [vmem:[%s330 + $0x88] sm:$0xff]
        %v349 = vld [vmem:[%s330 + $0x90] sm:$0xff]
        %v350 = vld [vmem:[%s330 + $0x98] sm:$0xff]
        %v351 = vld [vmem:[%s330 + $0xa0] sm:$0xff]
        %v352 = vld [vmem:[%s330 + $0xa8] sm:$0xff]
        %v353 = vld [vmem:[%s330 + $0xb0] sm:$0xff]
        %v354 = vld [vmem:[%s330 + $0xb8] sm:$0xff]
        %v355 = vld [vmem:[%s330 + $0xc0] sm:$0xff]
        %v356 = vld [vmem:[%s330 + $0xc8] sm:$0xff]
        %v357 = vld [vmem:[%s330 + $0xd0] sm:$0xff]
        %v358 = vld [vmem:[%s330 + $0xd8] sm:$0xff]
        %v359 = vld [vmem:[%s330 + $0xe0] sm:$0xff]
        %v360 = vld [vmem:[%s330 + $0xe8] sm:$0xff]
        %v361 = vld [vmem:[%s330 + $0xf0] sm:$0xff]
        %v362 = vld [vmem:[%s330 + $0xf8] sm:$0xff]
        %v363 = vld [vmem:[%s1] sm:$0xff]
        %v364 = vld [vmem:[%s2] sm:$0x1]
        %v366 = vperm.slane %v364, 0
        %vm368 = vcmask 64512
        %v370 = vsel %vm368, %v331, 0
        %v373 = vsel %vm368, %v332, 0
        %v376 = vsel %vm368, %v333, 0
        %v379 = vsel %vm368, %v334, 0
        %v382 = vsel %vm368, %v335, 0
        %v385 = vsel %vm368, %v336, 0
        %v388 = vsel %vm368, %v337, 0
        %v391 = vsel %vm368, %v338, 0
        %v394 = vsel %vm368, %v339, 0
        %v397 = vsel %vm368, %v340, 0
        %v400 = vsel %vm368, %v341, 0
        %v403 = vsel %vm368, %v342, 0
        %v406 = vsel %vm368, %v343, 0
        %v409 = vsel %vm368, %v344, 0
        %v412 = vsel %vm368, %v345, 0
        %v415 = vsel %vm368, %v346, 0
        %v418 = vsel %vm368, %v347, 0
        %v421 = vsel %vm368, %v348, 0
        %v424 = vsel %vm368, %v349, 0
        %v427 = vsel %vm368, %v350, 0
        %v430 = vsel %vm368, %v351, 0
        %v433 = vsel %vm368, %v352, 0
        %v436 = vsel %vm368, %v353, 0
        %v439 = vsel %vm368, %v354, 0
        %v442 = vsel %vm368, %v355, 0
        %v445 = vsel %vm368, %v356, 0
        %v448 = vsel %vm368, %v357, 0
        %v451 = vsel %vm368, %v358, 0
        %v454 = vsel %vm368, %v359, 0
        %v457 = vsel %vm368, %v360, 0
        %v460 = vsel %vm368, %v361, 0
        %v463 = vsel %vm368, %v362, 0
        %465 = vmatpush.msra.mxu0 0.0
        %466 = vmatpush.msra.mxu0 0.0
        %467 = vmatpush.msra.mxu0 0.0
        %468 = vmatpush.msra.mxu0 0.0
        %469 = vmatpush.msra.mxu0 0.0
        %470 = vmatpush.msra.mxu0 0.0
        %471 = vmatpush.msra.mxu0 0.0
        %472 = vmatpush.msra.mxu0 0.0
        %473 = vmatpush.msra.mxu0 0.0
        %474 = vmatpush.msra.mxu0 0.0
        %475 = vmatpush.msra.mxu0 0.0
        %476 = vmatpush.msra.mxu0 0.0
        %477 = vmatpush.msra.mxu0 0.0
        %478 = vmatpush.msra.mxu0 0.0
        %479 = vmatpush.msra.mxu0 0.0
        %480 = vmatpush.msra.mxu0 %v363
        %481 = vmatmul.f32.gmra.mxu0 %v370
        %v482 = vpop.f32.mrf.mxu0
        %v483 = vadd.f32 %v366, %v482
        %484 = vmatmul.f32.gmra.mxu0 %v373
        %v485 = vpop.f32.mrf.mxu0
        %v486 = vadd.f32 %v366, %v485
        %487 = vmatmul.f32.gmra.mxu0 %v376
        %v488 = vpop.f32.mrf.mxu0
        %v489 = vadd.f32 %v366, %v488
        %490 = vmatmul.f32.gmra.mxu0 %v379
        %v491 = vpop.f32.mrf.mxu0
        %v492 = vadd.f32 %v366, %v491
        %493 = vmatmul.f32.gmra.mxu0 %v382
        %v494 = vpop.f32.mrf.mxu0
        %v495 = vadd.f32 %v366, %v494
        %496 = vmatmul.f32.gmra.mxu0 %v385
        %v497 = vpop.f32.mrf.mxu0
        %v498 = vadd.f32 %v366, %v497
        %499 = vmatmul.f32.gmra.mxu0 %v388
        %v500 = vpop.f32.mrf.mxu0
        %v501 = vadd.f32 %v366, %v500
        %502 = vmatmul.f32.gmra.mxu0 %v391
        %v503 = vpop.f32.mrf.mxu0
        %v504 = vadd.f32 %v366, %v503
        %505 = vmatmul.f32.gmra.mxu0 %v394
        %v506 = vpop.f32.mrf.mxu0
        %v507 = vadd.f32 %v366, %v506
        %508 = vmatmul.f32.gmra.mxu0 %v397
        %v509 = vpop.f32.mrf.mxu0
        %v510 = vadd.f32 %v366, %v509
        %511 = vmatmul.f32.gmra.mxu0 %v400
        %v512 = vpop.f32.mrf.mxu0
        %v513 = vadd.f32 %v366, %v512
        %514 = vmatmul.f32.gmra.mxu0 %v403
        %v515 = vpop.f32.mrf.mxu0
        %v516 = vadd.f32 %v366, %v515
        %517 = vmatmul.f32.gmra.mxu0 %v406
        %v518 = vpop.f32.mrf.mxu0
        %v519 = vadd.f32 %v366, %v518
        %520 = vmatmul.f32.gmra.mxu0 %v409
        %v521 = vpop.f32.mrf.mxu0
        %v522 = vadd.f32 %v366, %v521
        %523 = vmatmul.f32.gmra.mxu0 %v412
        %v524 = vpop.f32.mrf.mxu0
        %v525 = vadd.f32 %v366, %v524
        %526 = vmatmul.f32.gmra.mxu0 %v415
        %v527 = vpop.f32.mrf.mxu0
        %v528 = vadd.f32 %v366, %v527
        %529 = vmatmul.f32.gmra.mxu0 %v418
        %v530 = vpop.f32.mrf.mxu0
        %v531 = vadd.f32 %v366, %v530
        %532 = vmatmul.f32.gmra.mxu0 %v421
        %v533 = vpop.f32.mrf.mxu0
        %v534 = vadd.f32 %v366, %v533
        %535 = vmatmul.f32.gmra.mxu0 %v424
        %v536 = vpop.f32.mrf.mxu0
        %v537 = vadd.f32 %v366, %v536
        %538 = vmatmul.f32.gmra.mxu0 %v427
        %v539 = vpop.f32.mrf.mxu0
        %v540 = vadd.f32 %v366, %v539
        %541 = vmatmul.f32.gmra.mxu0 %v430
        %v542 = vpop.f32.mrf.mxu0
        %v543 = vadd.f32 %v366, %v542
        %544 = vmatmul.f32.gmra.mxu0 %v433
        %v545 = vpop.f32.mrf.mxu0
        %v546 = vadd.f32 %v366, %v545
        %547 = vmatmul.f32.gmra.mxu0 %v436
        %v548 = vpop.f32.mrf.mxu0
        %v549 = vadd.f32 %v366, %v548
        %550 = vmatmul.f32.gmra.mxu0 %v439
        %v551 = vpop.f32.mrf.mxu0
        %v552 = vadd.f32 %v366, %v551
        %553 = vmatmul.f32.gmra.mxu0 %v442
        %v554 = vpop.f32.mrf.mxu0
        %v555 = vadd.f32 %v366, %v554
        %556 = vmatmul.f32.gmra.mxu0 %v445
        %v557 = vpop.f32.mrf.mxu0
        %v558 = vadd.f32 %v366, %v557
        %559 = vmatmul.f32.gmra.mxu0 %v448
        %v560 = vpop.f32.mrf.mxu0
        %v561 = vadd.f32 %v366, %v560
        %562 = vmatmul.f32.gmra.mxu0 %v451
        %v563 = vpop.f32.mrf.mxu0
        %v564 = vadd.f32 %v366, %v563
        %565 = vmatmul.f32.gmra.mxu0 %v454
        %v566 = vpop.f32.mrf.mxu0
        %v567 = vadd.f32 %v366, %v566
        %568 = vmatmul.f32.gmra.mxu0 %v457
        %v569 = vpop.f32.mrf.mxu0
        %v570 = vadd.f32 %v366, %v569
        %571 = vmatmul.f32.gmra.mxu0 %v460
        %v572 = vpop.f32.mrf.mxu0
        %v573 = vadd.f32 %v366, %v572
        %574 = vmatmul.f32.gmra.mxu0 %v463
        %v575 = vpop.f32.mrf.mxu0
        %v576 = vadd.f32 %v366, %v575
        %577 = vdwg.mxu0
        %v578 = vmax.f32 %v483, 0.0
        %v579 = vmax.f32 %v486, 0.0
        %v580 = vmax.f32 %v489, 0.0
        %v581 = vmax.f32 %v492, 0.0
        %v582 = vmax.f32 %v495, 0.0
        %v583 = vmax.f32 %v498, 0.0
        %v584 = vmax.f32 %v501, 0.0
        %v585 = vmax.f32 %v504, 0.0
        %v586 = vmax.f32 %v507, 0.0
        %v587 = vmax.f32 %v510, 0.0
        %v588 = vmax.f32 %v513, 0.0
        %v589 = vmax.f32 %v516, 0.0
        %v590 = vmax.f32 %v519, 0.0
        %v591 = vmax.f32 %v522, 0.0
        %v592 = vmax.f32 %v525, 0.0
        %v593 = vmax.f32 %v528, 0.0
        %v594 = vmax.f32 %v531, 0.0
        %v595 = vmax.f32 %v534, 0.0
        %v596 = vmax.f32 %v537, 0.0
        %v597 = vmax.f32 %v540, 0.0
        %v598 = vmax.f32 %v543, 0.0
        %v599 = vmax.f32 %v546, 0.0
        %v600 = vmax.f32 %v549, 0.0
        %v601 = vmax.f32 %v552, 0.0
        %v602 = vmax.f32 %v555, 0.0
        %v603 = vmax.f32 %v558, 0.0
        %v604 = vmax.f32 %v561, 0.0
        %v605 = vmax.f32 %v564, 0.0
        %v606 = vmax.f32 %v567, 0.0
        %v607 = vmax.f32 %v570, 0.0
        %v608 = vmax.f32 %v573, 0.0
        %v609 = vmax.f32 %v576, 0.0
        %vm610 = vcmask 31744
        %611 = vst.msk [vmem:[#allocation2] sm:$0xff] %vm610, 0.0
        %612 = vst.msk [vmem:[#allocation2 + $0x8] sm:$0xff] %vm610, 0.0
        %613 = vst.msk [vmem:[#allocation2 + $0x10] sm:$0xff] %vm610, 0.0
        %614 = vst.msk [vmem:[#allocation2 + $0x18] sm:$0xff] %vm610, 0.0
        %615 = vst.msk [vmem:[#allocation2 + $0xa0] sm:$0xff] %vm610, 0.0
        %616 = vst.msk [vmem:[#allocation2 + $0xa8] sm:$0xff] %vm610, 0.0
        %617 = vst.msk [vmem:[#allocation2 + $0x20] sm:$0xff] %vm610, %v602
        %618 = vst.msk [vmem:[#allocation2 + $0x28] sm:$0xff] %vm610, 0.0
        %619 = vst.msk [vmem:[#allocation2 + $0x30] sm:$0xff] %vm610, %v603
        %620 = vst.msk [vmem:[#allocation2 + $0x38] sm:$0xff] %vm610, 0.0
        %621 = vst.msk [vmem:[#allocation2 + $0x40] sm:$0xff] %vm610, %v604
        %622 = vst.msk [vmem:[#allocation2 + $0x48] sm:$0xff] %vm610, 0.0
        %623 = vst.msk [vmem:[#allocation2 + $0x50] sm:$0xff] %vm610, %v605
        %624 = vst.msk [vmem:[#allocation2 + $0x58] sm:$0xff] %vm610, 0.0
        %625 = vst.msk [vmem:[#allocation2 + $0x60] sm:$0xff] %vm610, %v606
        %626 = vst.msk [vmem:[#allocation2 + $0x68] sm:$0xff] %vm610, 0.0
        %627 = vst.msk [vmem:[#allocation2 + $0x70] sm:$0xff] %vm610, %v607
        %628 = vst.msk [vmem:[#allocation2 + $0x78] sm:$0xff] %vm610, 0.0
        %629 = vst.msk [vmem:[#allocation2 + $0x80] sm:$0xff] %vm610, %v608
        %630 = vst.msk [vmem:[#allocation2 + $0x88] sm:$0xff] %vm610, 0.0
        %631 = vst.msk [vmem:[#allocation2 + $0x90] sm:$0xff] %vm610, %v609
        %632 = vst.msk [vmem:[#allocation2 + $0x98] sm:$0xff] %vm610, 0.0
        %633 = vst.msk [vmem:[#allocation3] sm:$0xff] %vm610, 0.0
        %634 = vst.msk [vmem:[#allocation3 + $0x8] sm:$0xff] %vm610, 0.0
        %635 = vst.msk [vmem:[#allocation3 + $0x10] sm:$0xff] %vm610, 0.0
        %636 = vst.msk [vmem:[#allocation3 + $0x18] sm:$0xff] %vm610, 0.0
        %637 = vst.msk [vmem:[#allocation3 + $0xa0] sm:$0xff] %vm610, 0.0
        %638 = vst.msk [vmem:[#allocation3 + $0xa8] sm:$0xff] %vm610, 0.0
        %639 = vst.msk [vmem:[#allocation3 + $0x20] sm:$0xff] %vm610, %v594
        %640 = vst.msk [vmem:[#allocation3 + $0x30] sm:$0xff] %vm610, %v595
        %641 = vst.msk [vmem:[#allocation3 + $0x40] sm:$0xff] %vm610, %v596
        %642 = vst.msk [vmem:[#allocation3 + $0x50] sm:$0xff] %vm610, %v597
        %643 = vst.msk [vmem:[#allocation3 + $0x60] sm:$0xff] %vm610, %v598
        %644 = vst.msk [vmem:[#allocation3 + $0x70] sm:$0xff] %vm610, %v599
        %645 = vst.msk [vmem:[#allocation3 + $0x80] sm:$0xff] %vm610, %v600
        %646 = vst.msk [vmem:[#allocation3 + $0x90] sm:$0xff] %vm610, %v601
        %647 = vst.msk [vmem:[#allocation4] sm:$0xff] %vm610, 0.0
        %648 = vst.msk [vmem:[#allocation4 + $0x8] sm:$0xff] %vm610, 0.0
        %649 = vst.msk [vmem:[#allocation4 + $0x10] sm:$0xff] %vm610, 0.0
        %650 = vst.msk [vmem:[#allocation4 + $0x18] sm:$0xff] %vm610, 0.0
        %651 = vst.msk [vmem:[#allocation4 + $0x90] sm:$0xff] %vm610, 0.0
        %652 = vst.msk [vmem:[#allocation4 + $0x98] sm:$0xff] %vm610, 0.0
        %653 = vst.msk [vmem:[#allocation4 + $0x10] sm:$0xff] %vm610, %v586
        %654 = vst.msk [vmem:[#allocation4 + $0x18] sm:$0xff] %vm610, 0.0
        %655 = vst.msk [vmem:[#allocation4 + $0x20] sm:$0xff] %vm610, %v587
        %656 = vst.msk [vmem:[#allocation4 + $0x28] sm:$0xff] %vm610, 0.0
        %657 = vst.msk [vmem:[#allocation4 + $0x30] sm:$0xff] %vm610, %v588
        %658 = vst.msk [vmem:[#allocation4 + $0x38] sm:$0xff] %vm610, 0.0
        %659 = vst.msk [vmem:[#allocation4 + $0x40] sm:$0xff] %vm610, %v589
        %660 = vst.msk [vmem:[#allocation4 + $0x48] sm:$0xff] %vm610, 0.0
        %661 = vst.msk [vmem:[#allocation4 + $0x50] sm:$0xff] %vm610, %v590
        %662 = vst.msk [vmem:[#allocation4 + $0x58] sm:$0xff] %vm610, 0.0
        %663 = vst.msk [vmem:[#allocation4 + $0x60] sm:$0xff] %vm610, %v591
        %664 = vst.msk [vmem:[#allocation4 + $0x68] sm:$0xff] %vm610, 0.0
        %665 = vst.msk [vmem:[#allocation4 + $0x70] sm:$0xff] %vm610, %v592
        %666 = vst.msk [vmem:[#allocation4 + $0x78] sm:$0xff] %vm610, 0.0
        %667 = vst.msk [vmem:[#allocation4 + $0x80] sm:$0xff] %vm610, %v593
        %668 = vst.msk [vmem:[#allocation4 + $0x88] sm:$0xff] %vm610, 0.0
        %669 = vst.msk [vmem:[#allocation5] sm:$0xff] %vm610, 0.0
        %670 = vst.msk [vmem:[#allocation5 + $0x8] sm:$0xff] %vm610, 0.0
        %671 = vst.msk [vmem:[#allocation5 + $0x10] sm:$0xff] %vm610, 0.0
        %672 = vst.msk [vmem:[#allocation5 + $0x18] sm:$0xff] %vm610, 0.0
        %673 = vst.msk [vmem:[#allocation5 + $0x90] sm:$0xff] %vm610, 0.0
        %674 = vst.msk [vmem:[#allocation5 + $0x98] sm:$0xff] %vm610, 0.0
        %675 = vst.msk [vmem:[#allocation5 + $0x10] sm:$0xff] %vm610, %v578
        %676 = vst.msk [vmem:[#allocation5 + $0x20] sm:$0xff] %vm610, %v579
        %677 = vst.msk [vmem:[#allocation5 + $0x30] sm:$0xff] %vm610, %v580
        %678 = vst.msk [vmem:[#allocation5 + $0x40] sm:$0xff] %vm610, %v581
        %679 = vst.msk [vmem:[#allocation5 + $0x50] sm:$0xff] %vm610, %v582
        %680 = vst.msk [vmem:[#allocation5 + $0x60] sm:$0xff] %vm610, %v583
        %681 = vst.msk [vmem:[#allocation5 + $0x70] sm:$0xff] %vm610, %v584
        %682 = vst.msk [vmem:[#allocation5 + $0x80] sm:$0xff] %vm610, %v585
        %v683 = vld [vmem:[#allocation2 + $0xf] sm:$0xff]
        %v684 = vld [vmem:[#allocation2 + $0x17] sm:$0xff]
        %v685 = vld [vmem:[#allocation2 + $0x1f] sm:$0xff]
        %v686 = vld [vmem:[#allocation2 + $0x27] sm:$0xff]
        %v687 = vld [vmem:[#allocation2 + $0x2f] sm:$0xff]
        %v688 = vld [vmem:[#allocation2 + $0x37] sm:$0xff]
        %v689 = vld [vmem:[#allocation2 + $0x3f] sm:$0xff]
        %v690 = vld [vmem:[#allocation2 + $0x47] sm:$0xff]
        %v691 = vld [vmem:[#allocation2 + $0x4f] sm:$0xff]
        %v692 = vld [vmem:[#allocation2 + $0x57] sm:$0xff]
        %v693 = vld [vmem:[#allocation2 + $0x5f] sm:$0xff]
        %v694 = vld [vmem:[#allocation2 + $0x67] sm:$0xff]
        %v695 = vld [vmem:[#allocation2 + $0x6f] sm:$0xff]
        %v696 = vld [vmem:[#allocation2 + $0x77] sm:$0xff]
        %v697 = vld [vmem:[#allocation2 + $0x7f] sm:$0xff]
        %v698 = vld [vmem:[#allocation2 + $0x87] sm:$0xff]
        %v699 = vld [vmem:[%s3] sm:$0xf]
        %v700 = vld [vmem:[#allocation3 + $0x10] sm:$0xff]
        %v701 = vld [vmem:[#allocation3 + $0x18] sm:$0xff]
        %v702 = vld [vmem:[#allocation3 + $0x20] sm:$0xff]
        %v703 = vld [vmem:[#allocation3 + $0x28] sm:$0xff]
        %v704 = vld [vmem:[#allocation3 + $0x30] sm:$0xff]
        %v705 = vld [vmem:[#allocation3 + $0x38] sm:$0xff]
        %v706 = vld [vmem:[#allocation3 + $0x40] sm:$0xff]
        %v707 = vld [vmem:[#allocation3 + $0x48] sm:$0xff]
        %v708 = vld [vmem:[#allocation3 + $0x50] sm:$0xff]
        %v709 = vld [vmem:[#allocation3 + $0x58] sm:$0xff]
        %v710 = vld [vmem:[#allocation3 + $0x60] sm:$0xff]
        %v711 = vld [vmem:[#allocation3 + $0x68] sm:$0xff]
        %v712 = vld [vmem:[#allocation3 + $0x70] sm:$0xff]
        %v713 = vld [vmem:[#allocation3 + $0x78] sm:$0xff]
        %v714 = vld [vmem:[#allocation3 + $0x80] sm:$0xff]
        %v715 = vld [vmem:[#allocation3 + $0x88] sm:$0xff]
        %s716 = scalar_lea.vmem %s3, 4
        %v717 = vld [vmem:[%s716] sm:$0xf]
        %v719 = vsel %vm610, %v700, 0
        %v722 = vsel %vm610, %v701, 0
        %v725 = vsel %vm610, %v702, 0
        %v728 = vsel %vm610, %v703, 0
        %v731 = vsel %vm610, %v704, 0
        %v734 = vsel %vm610, %v705, 0
        %v737 = vsel %vm610, %v706, 0
        %v740 = vsel %vm610, %v707, 0
        %v743 = vsel %vm610, %v708, 0
        %v746 = vsel %vm610, %v709, 0
        %v749 = vsel %vm610, %v710, 0
        %v752 = vsel %vm610, %v711, 0
        %v755 = vsel %vm610, %v712, 0
        %v758 = vsel %vm610, %v713, 0
        %v761 = vsel %vm610, %v714, 0
        %v764 = vsel %vm610, %v715, 0
        %vm766 = vcmask 1043456
        %v768 = vsel %vm766, %v717, 0
        %770 = vmatpush.msra.mxu0 0.0
        %771 = vmatpush.msra.mxu0 0.0
        %772 = vmatpush.msra.mxu0 0.0
        %773 = vmatpush.msra.mxu0 0.0
        %774 = vmatpush.msra.mxu0 0.0
        %775 = vmatpush.msra.mxu0 0.0
        %776 = vmatpush.msra.mxu0 0.0
        %777 = vmatpush.msra.mxu0 0.0
        %778 = vmatpush.msra.mxu0 0.0
        %779 = vmatpush.msra.mxu0 0.0
        %780 = vmatpush.msra.mxu0 0.0
        %781 = vmatpush.msra.mxu0 0.0
        %782 = vmatpush.msra.mxu0 0.0
        %783 = vmatpush.msra.mxu0 0.0
        %784 = vmatpush.msra.mxu0 0.0
        %785 = vmatpush.msra.mxu0 %v768
        %786 = vmatmul.f32.gmra.mxu0 %v719
        %v787 = vpop.f32.mrf.mxu0
        %v788 = vadd.f32 0.0, %v787
        %789 = vmatmul.f32.gmra.mxu0 %v722
        %v790 = vpop.f32.mrf.mxu0
        %791 = vmatmul.f32.gmra.mxu0 %v725
        %v792 = vpop.f32.mrf.mxu0
        %v793 = vadd.f32 0.0, %v792
        %794 = vmatmul.f32.gmra.mxu0 %v728
        %v795 = vpop.f32.mrf.mxu0
        %796 = vmatmul.f32.gmra.mxu0 %v731
        %v797 = vpop.f32.mrf.mxu0
        %v798 = vadd.f32 0.0, %v797
        %799 = vmatmul.f32.gmra.mxu0 %v734
        %v800 = vpop.f32.mrf.mxu0
        %801 = vmatmul.f32.gmra.mxu0 %v737
        %v802 = vpop.f32.mrf.mxu0
        %v803 = vadd.f32 0.0, %v802
        %804 = vmatmul.f32.gmra.mxu0 %v740
        %v805 = vpop.f32.mrf.mxu0
        %806 = vmatmul.f32.gmra.mxu0 %v743
        %v807 = vpop.f32.mrf.mxu0
        %v808 = vadd.f32 0.0, %v807
        %809 = vmatmul.f32.gmra.mxu0 %v746
        %v810 = vpop.f32.mrf.mxu0
        %811 = vmatmul.f32.gmra.mxu0 %v749
        %v812 = vpop.f32.mrf.mxu0
        %v813 = vadd.f32 0.0, %v812
        %814 = vmatmul.f32.gmra.mxu0 %v752
        %v815 = vpop.f32.mrf.mxu0
        %816 = vmatmul.f32.gmra.mxu0 %v755
        %v817 = vpop.f32.mrf.mxu0
        %v818 = vadd.f32 0.0, %v817
        %819 = vmatmul.f32.gmra.mxu0 %v758
        %v820 = vpop.f32.mrf.mxu0
        %821 = vmatmul.f32.gmra.mxu0 %v761
        %v822 = vpop.f32.mrf.mxu0
        %v823 = vadd.f32 0.0, %v822
        %824 = vmatmul.f32.gmra.mxu0 %v764
        %v825 = vpop.f32.mrf.mxu0
        %826 = vdwg.mxu0
        %v828 = vsel %vm610, %v683, 0
        %v831 = vsel %vm610, %v684, 0
        %v834 = vsel %vm610, %v685, 0
        %v837 = vsel %vm610, %v686, 0
        %v840 = vsel %vm610, %v687, 0
        %v843 = vsel %vm610, %v688, 0
        %v846 = vsel %vm610, %v689, 0
        %v849 = vsel %vm610, %v690, 0
        %v852 = vsel %vm610, %v691, 0
        %v855 = vsel %vm610, %v692, 0
        %v858 = vsel %vm610, %v693, 0
        %v861 = vsel %vm610, %v694, 0
        %v864 = vsel %vm610, %v695, 0
        %v867 = vsel %vm610, %v696, 0
        %v870 = vsel %vm610, %v697, 0
        %v873 = vsel %vm610, %v698, 0
        %v876 = vsel %vm766, %v699, 0
        %878 = vmatpush.msra.mxu0 0.0
        %879 = vmatpush.msra.mxu0 0.0
        %880 = vmatpush.msra.mxu0 0.0
        %881 = vmatpush.msra.mxu0 0.0
        %882 = vmatpush.msra.mxu0 0.0
        %883 = vmatpush.msra.mxu0 0.0
        %884 = vmatpush.msra.mxu0 0.0
        %885 = vmatpush.msra.mxu0 0.0
        %886 = vmatpush.msra.mxu0 0.0
        %887 = vmatpush.msra.mxu0 0.0
        %888 = vmatpush.msra.mxu0 0.0
        %889 = vmatpush.msra.mxu0 0.0
        %890 = vmatpush.msra.mxu0 0.0
        %891 = vmatpush.msra.mxu0 0.0
        %892 = vmatpush.msra.mxu0 0.0
        %893 = vmatpush.msra.mxu0 %v876
        %894 = vmatmul.f32.gmra.mxu0 %v828
        %v895 = vpop.f32.mrf.mxu0
        %v896 = vadd.f32 %v788, %v895
        %897 = vmatmul.f32.gmra.mxu0 %v831
        %v898 = vpop.f32.mrf.mxu0
        %899 = vmatmul.f32.gmra.mxu0 %v834
        %v900 = vpop.f32.mrf.mxu0
        %v901 = vadd.f32 %v793, %v900
        %902 = vmatmul.f32.gmra.mxu0 %v837
        %v903 = vpop.f32.mrf.mxu0
        %904 = vmatmul.f32.gmra.mxu0 %v840
        %v905 = vpop.f32.mrf.mxu0
        %v906 = vadd.f32 %v798, %v905
        %907 = vmatmul.f32.gmra.mxu0 %v843
        %v908 = vpop.f32.mrf.mxu0
        %909 = vmatmul.f32.gmra.mxu0 %v846
        %v910 = vpop.f32.mrf.mxu0
        %v911 = vadd.f32 %v803, %v910
        %912 = vmatmul.f32.gmra.mxu0 %v849
        %v913 = vpop.f32.mrf.mxu0
        %914 = vmatmul.f32.gmra.mxu0 %v852
        %v915 = vpop.f32.mrf.mxu0
        %v916 = vadd.f32 %v808, %v915
        %917 = vmatmul.f32.gmra.mxu0 %v855
        %v918 = vpop.f32.mrf.mxu0
        %919 = vmatmul.f32.gmra.mxu0 %v858
        %v920 = vpop.f32.mrf.mxu0
        %v921 = vadd.f32 %v813, %v920
        %922 = vmatmul.f32.gmra.mxu0 %v861
        %v923 = vpop.f32.mrf.mxu0
        %924 = vmatmul.f32.gmra.mxu0 %v864
        %v925 = vpop.f32.mrf.mxu0
        %v926 = vadd.f32 %v818, %v925
        %927 = vmatmul.f32.gmra.mxu0 %v867
        %v928 = vpop.f32.mrf.mxu0
        %929 = vmatmul.f32.gmra.mxu0 %v870
        %v930 = vpop.f32.mrf.mxu0
        %v931 = vadd.f32 %v823, %v930
        %932 = vmatmul.f32.gmra.mxu0 %v873
        %v933 = vpop.f32.mrf.mxu0
        %934 = vdwg.mxu0
        %v935 = vld [vmem:[#allocation2 + $0x10] sm:$0xff]
        %v936 = vld [vmem:[#allocation2 + $0x18] sm:$0xff]
        %v937 = vld [vmem:[#allocation2 + $0x20] sm:$0xff]
        %v938 = vld [vmem:[#allocation2 + $0x28] sm:$0xff]
        %v939 = vld [vmem:[#allocation2 + $0x30] sm:$0xff]
        %v940 = vld [vmem:[#allocation2 + $0x38] sm:$0xff]
        %v941 = vld [vmem:[#allocation2 + $0x40] sm:$0xff]
        %v942 = vld [vmem:[#allocation2 + $0x48] sm:$0xff]
        %v943 = vld [vmem:[#allocation2 + $0x50] sm:$0xff]
        %v944 = vld [vmem:[#allocation2 + $0x58] sm:$0xff]
        %v945 = vld [vmem:[#allocation2 + $0x60] sm:$0xff]
        %v946 = vld [vmem:[#allocation2 + $0x68] sm:$0xff]
        %v947 = vld [vmem:[#allocation2 + $0x70] sm:$0xff]
        %v948 = vld [vmem:[#allocation2 + $0x78] sm:$0xff]
        %v949 = vld [vmem:[#allocation2 + $0x80] sm:$0xff]
        %v950 = vld [vmem:[#allocation2 + $0x88] sm:$0xff]
        %s951 = scalar_lea.vmem %s3, 8
        %v952 = vld [vmem:[%s951] sm:$0xf]
        %v954 = vsel %vm610, %v935, 0
        %v957 = vsel %vm610, %v936, 0
        %v960 = vsel %vm610, %v937, 0
        %v963 = vsel %vm610, %v938, 0
        %v966 = vsel %vm610, %v939, 0
        %v969 = vsel %vm610, %v940, 0
        %v972 = vsel %vm610, %v941, 0
        %v975 = vsel %vm610, %v942, 0
        %v978 = vsel %vm610, %v943, 0
        %v981 = vsel %vm610, %v944, 0
        %v984 = vsel %vm610, %v945, 0
        %v987 = vsel %vm610, %v946, 0
        %v990 = vsel %vm610, %v947, 0
        %v993 = vsel %vm610, %v948, 0
        %v996 = vsel %vm610, %v949, 0
        %v999 = vsel %vm610, %v950, 0
        %v1002 = vsel %vm766, %v952, 0
        %1004 = vmatpush.msra.mxu0 0.0
        %1005 = vmatpush.msra.mxu0 0.0
        %1006 = vmatpush.msra.mxu0 0.0
        %1007 = vmatpush.msra.mxu0 0.0
        %1008 = vmatpush.msra.mxu0 0.0
        %1009 = vmatpush.msra.mxu0 0.0
        %1010 = vmatpush.msra.mxu0 0.0
        %1011 = vmatpush.msra.mxu0 0.0
        %1012 = vmatpush.msra.mxu0 0.0
        %1013 = vmatpush.msra.mxu0 0.0
        %1014 = vmatpush.msra.mxu0 0.0
        %1015 = vmatpush.msra.mxu0 0.0
        %1016 = vmatpush.msra.mxu0 0.0
        %1017 = vmatpush.msra.mxu0 0.0
        %1018 = vmatpush.msra.mxu0 0.0
        %1019 = vmatpush.msra.mxu0 %v1002
        %1020 = vmatmul.f32.gmra.mxu0 %v954
        %v1021 = vpop.f32.mrf.mxu0
        %v1022 = vadd.f32 0.0, %v1021
        %1023 = vmatmul.f32.gmra.mxu0 %v957
        %v1024 = vpop.f32.mrf.mxu0
        %1025 = vmatmul.f32.gmra.mxu0 %v960
        %v1026 = vpop.f32.mrf.mxu0
        %v1027 = vadd.f32 0.0, %v1026
        %1028 = vmatmul.f32.gmra.mxu0 %v963
        %v1029 = vpop.f32.mrf.mxu0
        %1030 = vmatmul.f32.gmra.mxu0 %v966
        %v1031 = vpop.f32.mrf.mxu0
        %v1032 = vadd.f32 0.0, %v1031
        %1033 = vmatmul.f32.gmra.mxu0 %v969
        %v1034 = vpop.f32.mrf.mxu0
        %1035 = vmatmul.f32.gmra.mxu0 %v972
        %v1036 = vpop.f32.mrf.mxu0
        %v1037 = vadd.f32 0.0, %v1036
        %1038 = vmatmul.f32.gmra.mxu0 %v975
        %v1039 = vpop.f32.mrf.mxu0
        %1040 = vmatmul.f32.gmra.mxu0 %v978
        %v1041 = vpop.f32.mrf.mxu0
        %v1042 = vadd.f32 0.0, %v1041
        %1043 = vmatmul.f32.gmra.mxu0 %v981
        %v1044 = vpop.f32.mrf.mxu0
        %1045 = vmatmul.f32.gmra.mxu0 %v984
        %v1046 = vpop.f32.mrf.mxu0
        %v1047 = vadd.f32 0.0, %v1046
        %1048 = vmatmul.f32.gmra.mxu0 %v987
        %v1049 = vpop.f32.mrf.mxu0
        %1050 = vmatmul.f32.gmra.mxu0 %v990
        %v1051 = vpop.f32.mrf.mxu0
        %v1052 = vadd.f32 0.0, %v1051
        %1053 = vmatmul.f32.gmra.mxu0 %v993
        %v1054 = vpop.f32.mrf.mxu0
        %1055 = vmatmul.f32.gmra.mxu0 %v996
        %v1056 = vpop.f32.mrf.mxu0
        %v1057 = vadd.f32 0.0, %v1056
        %1058 = vmatmul.f32.gmra.mxu0 %v999
        %v1059 = vpop.f32.mrf.mxu0
        %1060 = vdwg.mxu0
        %v1061 = vadd.f32 %v896, %v1022
        %v1062 = vadd.f32 %v901, %v1027
        %v1063 = vadd.f32 %v906, %v1032
        %v1064 = vadd.f32 %v911, %v1037
        %v1065 = vadd.f32 %v916, %v1042
        %v1066 = vadd.f32 %v921, %v1047
        %v1067 = vadd.f32 %v926, %v1052
        %v1068 = vadd.f32 %v931, %v1057
        %v1069 = vld [vmem:[#allocation4 + $0xf] sm:$0xff]
        %v1070 = vld [vmem:[#allocation4 + $0x17] sm:$0xff]
        %v1071 = vld [vmem:[#allocation4 + $0x1f] sm:$0xff]
        %v1072 = vld [vmem:[#allocation4 + $0x27] sm:$0xff]
        %v1073 = vld [vmem:[#allocation4 + $0x2f] sm:$0xff]
        %v1074 = vld [vmem:[#allocation4 + $0x37] sm:$0xff]
        %v1075 = vld [vmem:[#allocation4 + $0x3f] sm:$0xff]
        %v1076 = vld [vmem:[#allocation4 + $0x47] sm:$0xff]
        %v1077 = vld [vmem:[#allocation4 + $0x4f] sm:$0xff]
        %v1078 = vld [vmem:[#allocation4 + $0x57] sm:$0xff]
        %v1079 = vld [vmem:[#allocation4 + $0x5f] sm:$0xff]
        %v1080 = vld [vmem:[#allocation4 + $0x67] sm:$0xff]
        %v1081 = vld [vmem:[#allocation4 + $0x6f] sm:$0xff]
        %v1082 = vld [vmem:[#allocation4 + $0x77] sm:$0xff]
        %v1083 = vld [vmem:[#allocation4 + $0x7f] sm:$0xff]
        %v1084 = vld [vmem:[#allocation4 + $0x87] sm:$0xff]
        %s1085 = scalar_lea.vmem %s3, 12
        %v1086 = vld [vmem:[%s1085] sm:$0xf]
        %v1088 = vsel %vm610, %v1069, 0
        %v1091 = vsel %vm610, %v1070, 0
        %v1094 = vsel %vm610, %v1071, 0
        %v1097 = vsel %vm610, %v1072, 0
        %v1100 = vsel %vm610, %v1073, 0
        %v1103 = vsel %vm610, %v1074, 0
        %v1106 = vsel %vm610, %v1075, 0
        %v1109 = vsel %vm610, %v1076, 0
        %v1112 = vsel %vm610, %v1077, 0
        %v1115 = vsel %vm610, %v1078, 0
        %v1118 = vsel %vm610, %v1079, 0
        %v1121 = vsel %vm610, %v1080, 0
        %v1124 = vsel %vm610, %v1081, 0
        %v1127 = vsel %vm610, %v1082, 0
        %v1130 = vsel %vm610, %v1083, 0
        %v1133 = vsel %vm610, %v1084, 0
        %v1136 = vsel %vm766, %v1086, 0
        %1138 = vmatpush.msra.mxu0 0.0
        %1139 = vmatpush.msra.mxu0 0.0
        %1140 = vmatpush.msra.mxu0 0.0
        %1141 = vmatpush.msra.mxu0 0.0
        %1142 = vmatpush.msra.mxu0 0.0
        %1143 = vmatpush.msra.mxu0 0.0
        %1144 = vmatpush.msra.mxu0 0.0
        %1145 = vmatpush.msra.mxu0 0.0
        %1146 = vmatpush.msra.mxu0 0.0
        %1147 = vmatpush.msra.mxu0 0.0
        %1148 = vmatpush.msra.mxu0 0.0
        %1149 = vmatpush.msra.mxu0 0.0
        %1150 = vmatpush.msra.mxu0 0.0
        %1151 = vmatpush.msra.mxu0 0.0
        %1152 = vmatpush.msra.mxu0 0.0
        %1153 = vmatpush.msra.mxu0 %v1136
        %1154 = vmatmul.f32.gmra.mxu0 %v1088
        %v1155 = vpop.f32.mrf.mxu0
        %v1156 = vadd.f32 0.0, %v1155
        %1157 = vmatmul.f32.gmra.mxu0 %v1091
        %v1158 = vpop.f32.mrf.mxu0
        %1159 = vmatmul.f32.gmra.mxu0 %v1094
        %v1160 = vpop.f32.mrf.mxu0
        %v1161 = vadd.f32 0.0, %v1160
        %1162 = vmatmul.f32.gmra.mxu0 %v1097
        %v1163 = vpop.f32.mrf.mxu0
        %1164 = vmatmul.f32.gmra.mxu0 %v1100
        %v1165 = vpop.f32.mrf.mxu0
        %v1166 = vadd.f32 0.0, %v1165
        %1167 = vmatmul.f32.gmra.mxu0 %v1103
        %v1168 = vpop.f32.mrf.mxu0
        %1169 = vmatmul.f32.gmra.mxu0 %v1106
        %v1170 = vpop.f32.mrf.mxu0
        %v1171 = vadd.f32 0.0, %v1170
        %1172 = vmatmul.f32.gmra.mxu0 %v1109
        %v1173 = vpop.f32.mrf.mxu0
        %1174 = vmatmul.f32.gmra.mxu0 %v1112
        %v1175 = vpop.f32.mrf.mxu0
        %v1176 = vadd.f32 0.0, %v1175
        %1177 = vmatmul.f32.gmra.mxu0 %v1115
        %v1178 = vpop.f32.mrf.mxu0
        %1179 = vmatmul.f32.gmra.mxu0 %v1118
        %v1180 = vpop.f32.mrf.mxu0
        %v1181 = vadd.f32 0.0, %v1180
        %1182 = vmatmul.f32.gmra.mxu0 %v1121
        %v1183 = vpop.f32.mrf.mxu0
        %1184 = vmatmul.f32.gmra.mxu0 %v1124
        %v1185 = vpop.f32.mrf.mxu0
        %v1186 = vadd.f32 0.0, %v1185
        %1187 = vmatmul.f32.gmra.mxu0 %v1127
        %v1188 = vpop.f32.mrf.mxu0
        %1189 = vmatmul.f32.gmra.mxu0 %v1130
        %v1190 = vpop.f32.mrf.mxu0
        %v1191 = vadd.f32 0.0, %v1190
        %1192 = vmatmul.f32.gmra.mxu0 %v1133
        %v1193 = vpop.f32.mrf.mxu0
        %1194 = vdwg.mxu0
        %v1195 = vadd.f32 %v1061, %v1156
        %v1196 = vadd.f32 %v1062, %v1161
        %v1197 = vadd.f32 %v1063, %v1166
        %v1198 = vadd.f32 %v1064, %v1171
        %v1199 = vadd.f32 %v1065, %v1176
        %v1200 = vadd.f32 %v1066, %v1181
        %v1201 = vadd.f32 %v1067, %v1186
        %v1202 = vadd.f32 %v1068, %v1191
        %v1203 = vld [vmem:[#allocation5 + $0x10] sm:$0xff]
        %v1204 = vld [vmem:[#allocation5 + $0x18] sm:$0xff]
        %v1205 = vld [vmem:[#allocation5 + $0x20] sm:$0xff]
        %v1206 = vld [vmem:[#allocation5 + $0x28] sm:$0xff]
        %v1207 = vld [vmem:[#allocation5 + $0x30] sm:$0xff]
        %v1208 = vld [vmem:[#allocation5 + $0x38] sm:$0xff]
        %v1209 = vld [vmem:[#allocation5 + $0x40] sm:$0xff]
        %v1210 = vld [vmem:[#allocation5 + $0x48] sm:$0xff]
        %v1211 = vld [vmem:[#allocation5 + $0x50] sm:$0xff]
        %v1212 = vld [vmem:[#allocation5 + $0x58] sm:$0xff]
        %v1213 = vld [vmem:[#allocation5 + $0x60] sm:$0xff]
        %v1214 = vld [vmem:[#allocation5 + $0x68] sm:$0xff]
        %v1215 = vld [vmem:[#allocation5 + $0x70] sm:$0xff]
        %v1216 = vld [vmem:[#allocation5 + $0x78] sm:$0xff]
        %v1217 = vld [vmem:[#allocation5 + $0x80] sm:$0xff]
        %v1218 = vld [vmem:[#allocation5 + $0x88] sm:$0xff]
        %s1219 = scalar_lea.vmem %s3, 16
        %v1220 = vld [vmem:[%s1219] sm:$0xf]
        %v1222 = vsel %vm610, %v1203, 0
        %v1225 = vsel %vm610, %v1204, 0
        %v1228 = vsel %vm610, %v1205, 0
        %v1231 = vsel %vm610, %v1206, 0
        %v1234 = vsel %vm610, %v1207, 0
        %v1237 = vsel %vm610, %v1208, 0
        %v1240 = vsel %vm610, %v1209, 0
        %v1243 = vsel %vm610, %v1210, 0
        %v1246 = vsel %vm610, %v1211, 0
        %v1249 = vsel %vm610, %v1212, 0
        %v1252 = vsel %vm610, %v1213, 0
        %v1255 = vsel %vm610, %v1214, 0
        %v1258 = vsel %vm610, %v1215, 0
        %v1261 = vsel %vm610, %v1216, 0
        %v1264 = vsel %vm610, %v1217, 0
        %v1267 = vsel %vm610, %v1218, 0
        %v1270 = vsel %vm766, %v1220, 0
        %1272 = vmatpush.msra.mxu0 0.0
        %1273 = vmatpush.msra.mxu0 0.0
        %1274 = vmatpush.msra.mxu0 0.0
        %1275 = vmatpush.msra.mxu0 0.0
        %1276 = vmatpush.msra.mxu0 0.0
        %1277 = vmatpush.msra.mxu0 0.0
        %1278 = vmatpush.msra.mxu0 0.0
        %1279 = vmatpush.msra.mxu0 0.0
        %1280 = vmatpush.msra.mxu0 0.0
        %1281 = vmatpush.msra.mxu0 0.0
        %1282 = vmatpush.msra.mxu0 0.0
        %1283 = vmatpush.msra.mxu0 0.0
        %1284 = vmatpush.msra.mxu0 0.0
        %1285 = vmatpush.msra.mxu0 0.0
        %1286 = vmatpush.msra.mxu0 0.0
        %1287 = vmatpush.msra.mxu0 %v1270
        %1288 = vmatmul.f32.gmra.mxu0 %v1222
        %v1289 = vpop.f32.mrf.mxu0
        %v1290 = vadd.f32 0.0, %v1289
        %1291 = vmatmul.f32.gmra.mxu0 %v1225
        %v1292 = vpop.f32.mrf.mxu0
        %1293 = vmatmul.f32.gmra.mxu0 %v1228
        %v1294 = vpop.f32.mrf.mxu0
        %v1295 = vadd.f32 0.0, %v1294
        %1296 = vmatmul.f32.gmra.mxu0 %v1231
        %v1297 = vpop.f32.mrf.mxu0
        %1298 = vmatmul.f32.gmra.mxu0 %v1234
        %v1299 = vpop.f32.mrf.mxu0
        %v1300 = vadd.f32 0.0, %v1299
        %1301 = vmatmul.f32.gmra.mxu0 %v1237
        %v1302 = vpop.f32.mrf.mxu0
        %1303 = vmatmul.f32.gmra.mxu0 %v1240
        %v1304 = vpop.f32.mrf.mxu0
        %v1305 = vadd.f32 0.0, %v1304
        %1306 = vmatmul.f32.gmra.mxu0 %v1243
        %v1307 = vpop.f32.mrf.mxu0
        %1308 = vmatmul.f32.gmra.mxu0 %v1246
        %v1309 = vpop.f32.mrf.mxu0
        %v1310 = vadd.f32 0.0, %v1309
        %1311 = vmatmul.f32.gmra.mxu0 %v1249
        %v1312 = vpop.f32.mrf.mxu0
        %1313 = vmatmul.f32.gmra.mxu0 %v1252
        %v1314 = vpop.f32.mrf.mxu0
        %v1315 = vadd.f32 0.0, %v1314
        %1316 = vmatmul.f32.gmra.mxu0 %v1255
        %v1317 = vpop.f32.mrf.mxu0
        %1318 = vmatmul.f32.gmra.mxu0 %v1258
        %v1319 = vpop.f32.mrf.mxu0
        %v1320 = vadd.f32 0.0, %v1319
        %1321 = vmatmul.f32.gmra.mxu0 %v1261
        %v1322 = vpop.f32.mrf.mxu0
        %1323 = vmatmul.f32.gmra.mxu0 %v1264
        %v1324 = vpop.f32.mrf.mxu0
        %v1325 = vadd.f32 0.0, %v1324
        %1326 = vmatmul.f32.gmra.mxu0 %v1267
        %v1327 = vpop.f32.mrf.mxu0
        %1328 = vdwg.mxu0
        %v1329 = vadd.f32 %v1195, %v1290
        %v1330 = vadd.f32 %v1196, %v1295
        %v1331 = vadd.f32 %v1197, %v1300
        %v1332 = vadd.f32 %v1198, %v1305
        %v1333 = vadd.f32 %v1199, %v1310
        %v1334 = vadd.f32 %v1200, %v1315
        %v1335 = vadd.f32 %v1201, %v1320
        %v1336 = vadd.f32 %v1202, %v1325
        %v1337 = vld [vmem:[#allocation4 + $0x10] sm:$0xff]
        %v1338 = vld [vmem:[#allocation4 + $0x18] sm:$0xff]
        %v1339 = vld [vmem:[#allocation4 + $0x20] sm:$0xff]
        %v1340 = vld [vmem:[#allocation4 + $0x28] sm:$0xff]
        %v1341 = vld [vmem:[#allocation4 + $0x30] sm:$0xff]
        %v1342 = vld [vmem:[#allocation4 + $0x38] sm:$0xff]
        %v1343 = vld [vmem:[#allocation4 + $0x40] sm:$0xff]
        %v1344 = vld [vmem:[#allocation4 + $0x48] sm:$0xff]
        %v1345 = vld [vmem:[#allocation4 + $0x50] sm:$0xff]
        %v1346 = vld [vmem:[#allocation4 + $0x58] sm:$0xff]
        %v1347 = vld [vmem:[#allocation4 + $0x60] sm:$0xff]
        %v1348 = vld [vmem:[#allocation4 + $0x68] sm:$0xff]
        %v1349 = vld [vmem:[#allocation4 + $0x70] sm:$0xff]
        %v1350 = vld [vmem:[#allocation4 + $0x78] sm:$0xff]
        %v1351 = vld [vmem:[#allocation4 + $0x80] sm:$0xff]
        %v1352 = vld [vmem:[#allocation4 + $0x88] sm:$0xff]
        %s1353 = scalar_lea.vmem %s3, 20
        %v1354 = vld [vmem:[%s1353] sm:$0xf]
        %v1356 = vsel %vm610, %v1337, 0
        %v1359 = vsel %vm610, %v1338, 0
        %v1362 = vsel %vm610, %v1339, 0
        %v1365 = vsel %vm610, %v1340, 0
        %v1368 = vsel %vm610, %v1341, 0
        %v1371 = vsel %vm610, %v1342, 0
        %v1374 = vsel %vm610, %v1343, 0
        %v1377 = vsel %vm610, %v1344, 0
        %v1380 = vsel %vm610, %v1345, 0
        %v1383 = vsel %vm610, %v1346, 0
        %v1386 = vsel %vm610, %v1347, 0
        %v1389 = vsel %vm610, %v1348, 0
        %v1392 = vsel %vm610, %v1349, 0
        %v1395 = vsel %vm610, %v1350, 0
        %v1398 = vsel %vm610, %v1351, 0
        %v1401 = vsel %vm610, %v1352, 0
        %v1404 = vsel %vm766, %v1354, 0
        %1406 = vmatpush.msra.mxu0 0.0
        %1407 = vmatpush.msra.mxu0 0.0
        %1408 = vmatpush.msra.mxu0 0.0
        %1409 = vmatpush.msra.mxu0 0.0
        %1410 = vmatpush.msra.mxu0 0.0
        %1411 = vmatpush.msra.mxu0 0.0
        %1412 = vmatpush.msra.mxu0 0.0
        %1413 = vmatpush.msra.mxu0 0.0
        %1414 = vmatpush.msra.mxu0 0.0
        %1415 = vmatpush.msra.mxu0 0.0
        %1416 = vmatpush.msra.mxu0 0.0
        %1417 = vmatpush.msra.mxu0 0.0
        %1418 = vmatpush.msra.mxu0 0.0
        %1419 = vmatpush.msra.mxu0 0.0
        %1420 = vmatpush.msra.mxu0 0.0
        %1421 = vmatpush.msra.mxu0 %v1404
        %1422 = vmatmul.f32.gmra.mxu0 %v1356
        %v1423 = vpop.f32.mrf.mxu0
        %v1424 = vadd.f32 0.0, %v1423
        %1425 = vmatmul.f32.gmra.mxu0 %v1359
        %v1426 = vpop.f32.mrf.mxu0
        %1427 = vmatmul.f32.gmra.mxu0 %v1362
        %v1428 = vpop.f32.mrf.mxu0
        %v1429 = vadd.f32 0.0, %v1428
        %1430 = vmatmul.f32.gmra.mxu0 %v1365
        %v1431 = vpop.f32.mrf.mxu0
        %1432 = vmatmul.f32.gmra.mxu0 %v1368
        %v1433 = vpop.f32.mrf.mxu0
        %v1434 = vadd.f32 0.0, %v1433
        %1435 = vmatmul.f32.gmra.mxu0 %v1371
        %v1436 = vpop.f32.mrf.mxu0
        %1437 = vmatmul.f32.gmra.mxu0 %v1374
        %v1438 = vpop.f32.mrf.mxu0
        %v1439 = vadd.f32 0.0, %v1438
        %1440 = vmatmul.f32.gmra.mxu0 %v1377
        %v1441 = vpop.f32.mrf.mxu0
        %1442 = vmatmul.f32.gmra.mxu0 %v1380
        %v1443 = vpop.f32.mrf.mxu0
        %v1444 = vadd.f32 0.0, %v1443
        %1445 = vmatmul.f32.gmra.mxu0 %v1383
        %v1446 = vpop.f32.mrf.mxu0
        %1447 = vmatmul.f32.gmra.mxu0 %v1386
        %v1448 = vpop.f32.mrf.mxu0
        %v1449 = vadd.f32 0.0, %v1448
        %1450 = vmatmul.f32.gmra.mxu0 %v1389
        %v1451 = vpop.f32.mrf.mxu0
        %1452 = vmatmul.f32.gmra.mxu0 %v1392
        %v1453 = vpop.f32.mrf.mxu0
        %v1454 = vadd.f32 0.0, %v1453
        %1455 = vmatmul.f32.gmra.mxu0 %v1395
        %v1456 = vpop.f32.mrf.mxu0
        %1457 = vmatmul.f32.gmra.mxu0 %v1398
        %v1458 = vpop.f32.mrf.mxu0
        %v1459 = vadd.f32 0.0, %v1458
        %1460 = vmatmul.f32.gmra.mxu0 %v1401
        %v1461 = vpop.f32.mrf.mxu0
        %1462 = vdwg.mxu0
        %v1463 = vadd.f32 %v1329, %v1424
        %v1464 = vadd.f32 %v1330, %v1429
        %v1465 = vadd.f32 %v1331, %v1434
        %v1466 = vadd.f32 %v1332, %v1439
        %v1467 = vadd.f32 %v1333, %v1444
        %v1468 = vadd.f32 %v1334, %v1449
        %v1469 = vadd.f32 %v1335, %v1454
        %v1470 = vadd.f32 %v1336, %v1459
        %v1471 = vld [vmem:[#allocation2 + $0x1f] sm:$0xff]
        %v1472 = vld [vmem:[#allocation2 + $0x27] sm:$0xff]
        %v1473 = vld [vmem:[#allocation2 + $0x2f] sm:$0xff]
        %v1474 = vld [vmem:[#allocation2 + $0x37] sm:$0xff]
        %v1475 = vld [vmem:[#allocation2 + $0x3f] sm:$0xff]
        %v1476 = vld [vmem:[#allocation2 + $0x47] sm:$0xff]
        %v1477 = vld [vmem:[#allocation2 + $0x4f] sm:$0xff]
        %v1478 = vld [vmem:[#allocation2 + $0x57] sm:$0xff]
        %v1479 = vld [vmem:[#allocation2 + $0x5f] sm:$0xff]
        %v1480 = vld [vmem:[#allocation2 + $0x67] sm:$0xff]
        %v1481 = vld [vmem:[#allocation2 + $0x6f] sm:$0xff]
        %v1482 = vld [vmem:[#allocation2 + $0x77] sm:$0xff]
        %v1483 = vld [vmem:[#allocation2 + $0x7f] sm:$0xff]
        %v1484 = vld [vmem:[#allocation2 + $0x87] sm:$0xff]
        %v1485 = vld [vmem:[#allocation2 + $0x8f] sm:$0xff]
        %v1486 = vld [vmem:[#allocation2 + $0x97] sm:$0xff]
        %s1487 = scalar_lea.vmem %s3, 24
        %v1488 = vld [vmem:[%s1487] sm:$0xf]
        %v1490 = vsel %vm610, %v1471, 0
        %v1493 = vsel %vm610, %v1472, 0
        %v1496 = vsel %vm610, %v1473, 0
        %v1499 = vsel %vm610, %v1474, 0
        %v1502 = vsel %vm610, %v1475, 0
        %v1505 = vsel %vm610, %v1476, 0
        %v1508 = vsel %vm610, %v1477, 0
        %v1511 = vsel %vm610, %v1478, 0
        %v1514 = vsel %vm610, %v1479, 0
        %v1517 = vsel %vm610, %v1480, 0
        %v1520 = vsel %vm610, %v1481, 0
        %v1523 = vsel %vm610, %v1482, 0
        %v1526 = vsel %vm610, %v1483, 0
        %v1529 = vsel %vm610, %v1484, 0
        %v1532 = vsel %vm610, %v1485, 0
        %v1535 = vsel %vm610, %v1486, 0
        %v1538 = vsel %vm766, %v1488, 0
        %1540 = vmatpush.msra.mxu0 0.0
        %1541 = vmatpush.msra.mxu0 0.0
        %1542 = vmatpush.msra.mxu0 0.0
        %1543 = vmatpush.msra.mxu0 0.0
        %1544 = vmatpush.msra.mxu0 0.0
        %1545 = vmatpush.msra.mxu0 0.0
        %1546 = vmatpush.msra.mxu0 0.0
        %1547 = vmatpush.msra.mxu0 0.0
        %1548 = vmatpush.msra.mxu0 0.0
        %1549 = vmatpush.msra.mxu0 0.0
        %1550 = vmatpush.msra.mxu0 0.0
        %1551 = vmatpush.msra.mxu0 0.0
        %1552 = vmatpush.msra.mxu0 0.0
        %1553 = vmatpush.msra.mxu0 0.0
        %1554 = vmatpush.msra.mxu0 0.0
        %1555 = vmatpush.msra.mxu0 %v1538
        %1556 = vmatmul.f32.gmra.mxu0 %v1490
        %v1557 = vpop.f32.mrf.mxu0
        %v1558 = vadd.f32 0.0, %v1557
        %1559 = vmatmul.f32.gmra.mxu0 %v1493
        %v1560 = vpop.f32.mrf.mxu0
        %1561 = vmatmul.f32.gmra.mxu0 %v1496
        %v1562 = vpop.f32.mrf.mxu0
        %v1563 = vadd.f32 0.0, %v1562
        %1564 = vmatmul.f32.gmra.mxu0 %v1499
        %v1565 = vpop.f32.mrf.mxu0
        %1566 = vmatmul.f32.gmra.mxu0 %v1502
        %v1567 = vpop.f32.mrf.mxu0
        %v1568 = vadd.f32 0.0, %v1567
        %1569 = vmatmul.f32.gmra.mxu0 %v1505
        %v1570 = vpop.f32.mrf.mxu0
        %1571 = vmatmul.f32.gmra.mxu0 %v1508
        %v1572 = vpop.f32.mrf.mxu0
        %v1573 = vadd.f32 0.0, %v1572
        %1574 = vmatmul.f32.gmra.mxu0 %v1511
        %v1575 = vpop.f32.mrf.mxu0
        %1576 = vmatmul.f32.gmra.mxu0 %v1514
        %v1577 = vpop.f32.mrf.mxu0
        %v1578 = vadd.f32 0.0, %v1577
        %1579 = vmatmul.f32.gmra.mxu0 %v1517
        %v1580 = vpop.f32.mrf.mxu0
        %1581 = vmatmul.f32.gmra.mxu0 %v1520
        %v1582 = vpop.f32.mrf.mxu0
        %v1583 = vadd.f32 0.0, %v1582
        %1584 = vmatmul.f32.gmra.mxu0 %v1523
        %v1585 = vpop.f32.mrf.mxu0
        %1586 = vmatmul.f32.gmra.mxu0 %v1526
        %v1587 = vpop.f32.mrf.mxu0
        %v1588 = vadd.f32 0.0, %v1587
        %1589 = vmatmul.f32.gmra.mxu0 %v1529
        %v1590 = vpop.f32.mrf.mxu0
        %1591 = vmatmul.f32.gmra.mxu0 %v1532
        %v1592 = vpop.f32.mrf.mxu0
        %v1593 = vadd.f32 0.0, %v1592
        %1594 = vmatmul.f32.gmra.mxu0 %v1535
        %v1595 = vpop.f32.mrf.mxu0
        %1596 = vdwg.mxu0
        %v1597 = vadd.f32 %v1463, %v1558
        %v1598 = vadd.f32 %v1464, %v1563
        %v1599 = vadd.f32 %v1465, %v1568
        %v1600 = vadd.f32 %v1466, %v1573
        %v1601 = vadd.f32 %v1467, %v1578
        %v1602 = vadd.f32 %v1468, %v1583
        %v1603 = vadd.f32 %v1469, %v1588
        %v1604 = vadd.f32 %v1470, %v1593
        %v1605 = vld [vmem:[#allocation3 + $0x20] sm:$0xff]
        %v1606 = vld [vmem:[#allocation3 + $0x28] sm:$0xff]
        %v1607 = vld [vmem:[#allocation3 + $0x30] sm:$0xff]
        %v1608 = vld [vmem:[#allocation3 + $0x38] sm:$0xff]
        %v1609 = vld [vmem:[#allocation3 + $0x40] sm:$0xff]
        %v1610 = vld [vmem:[#allocation3 + $0x48] sm:$0xff]
        %v1611 = vld [vmem:[#allocation3 + $0x50] sm:$0xff]
        %v1612 = vld [vmem:[#allocation3 + $0x58] sm:$0xff]
        %v1613 = vld [vmem:[#allocation3 + $0x60] sm:$0xff]
        %v1614 = vld [vmem:[#allocation3 + $0x68] sm:$0xff]
        %v1615 = vld [vmem:[#allocation3 + $0x70] sm:$0xff]
        %v1616 = vld [vmem:[#allocation3 + $0x78] sm:$0xff]
        %v1617 = vld [vmem:[#allocation3 + $0x80] sm:$0xff]
        %v1618 = vld [vmem:[#allocation3 + $0x88] sm:$0xff]
        %v1619 = vld [vmem:[#allocation3 + $0x90] sm:$0xff]
        %v1620 = vld [vmem:[#allocation3 + $0x98] sm:$0xff]
        %s1621 = scalar_lea.vmem %s3, 28
        %v1622 = vld [vmem:[%s1621] sm:$0xf]
        %v1624 = vsel %vm610, %v1605, 0
        %v1627 = vsel %vm610, %v1606, 0
        %v1630 = vsel %vm610, %v1607, 0
        %v1633 = vsel %vm610, %v1608, 0
        %v1636 = vsel %vm610, %v1609, 0
        %v1639 = vsel %vm610, %v1610, 0
        %v1642 = vsel %vm610, %v1611, 0
        %v1645 = vsel %vm610, %v1612, 0
        %v1648 = vsel %vm610, %v1613, 0
        %v1651 = vsel %vm610, %v1614, 0
        %v1654 = vsel %vm610, %v1615, 0
        %v1657 = vsel %vm610, %v1616, 0
        %v1660 = vsel %vm610, %v1617, 0
        %v1663 = vsel %vm610, %v1618, 0
        %v1666 = vsel %vm610, %v1619, 0
        %v1669 = vsel %vm610, %v1620, 0
        %v1672 = vsel %vm766, %v1622, 0
        %1674 = vmatpush.msra.mxu0 0.0
        %1675 = vmatpush.msra.mxu0 0.0
        %1676 = vmatpush.msra.mxu0 0.0
        %1677 = vmatpush.msra.mxu0 0.0
        %1678 = vmatpush.msra.mxu0 0.0
        %1679 = vmatpush.msra.mxu0 0.0
        %1680 = vmatpush.msra.mxu0 0.0
        %1681 = vmatpush.msra.mxu0 0.0
        %1682 = vmatpush.msra.mxu0 0.0
        %1683 = vmatpush.msra.mxu0 0.0
        %1684 = vmatpush.msra.mxu0 0.0
        %1685 = vmatpush.msra.mxu0 0.0
        %1686 = vmatpush.msra.mxu0 0.0
        %1687 = vmatpush.msra.mxu0 0.0
        %1688 = vmatpush.msra.mxu0 0.0
        %1689 = vmatpush.msra.mxu0 %v1672
        %1690 = vmatmul.f32.gmra.mxu0 %v1624
        %v1691 = vpop.f32.mrf.mxu0
        %v1692 = vadd.f32 0.0, %v1691
        %1693 = vmatmul.f32.gmra.mxu0 %v1627
        %v1694 = vpop.f32.mrf.mxu0
        %1695 = vmatmul.f32.gmra.mxu0 %v1630
        %v1696 = vpop.f32.mrf.mxu0
        %v1697 = vadd.f32 0.0, %v1696
        %1698 = vmatmul.f32.gmra.mxu0 %v1633
        %v1699 = vpop.f32.mrf.mxu0
        %1700 = vmatmul.f32.gmra.mxu0 %v1636
        %v1701 = vpop.f32.mrf.mxu0
        %v1702 = vadd.f32 0.0, %v1701
        %1703 = vmatmul.f32.gmra.mxu0 %v1639
        %v1704 = vpop.f32.mrf.mxu0
        %1705 = vmatmul.f32.gmra.mxu0 %v1642
        %v1706 = vpop.f32.mrf.mxu0
        %v1707 = vadd.f32 0.0, %v1706
        %1708 = vmatmul.f32.gmra.mxu0 %v1645
        %v1709 = vpop.f32.mrf.mxu0
        %1710 = vmatmul.f32.gmra.mxu0 %v1648
        %v1711 = vpop.f32.mrf.mxu0
        %v1712 = vadd.f32 0.0, %v1711
        %1713 = vmatmul.f32.gmra.mxu0 %v1651
        %v1714 = vpop.f32.mrf.mxu0
        %1715 = vmatmul.f32.gmra.mxu0 %v1654
        %v1716 = vpop.f32.mrf.mxu0
        %v1717 = vadd.f32 0.0, %v1716
        %1718 = vmatmul.f32.gmra.mxu0 %v1657
        %v1719 = vpop.f32.mrf.mxu0
        %1720 = vmatmul.f32.gmra.mxu0 %v1660
        %v1721 = vpop.f32.mrf.mxu0
        %v1722 = vadd.f32 0.0, %v1721
        %1723 = vmatmul.f32.gmra.mxu0 %v1663
        %v1724 = vpop.f32.mrf.mxu0
        %1725 = vmatmul.f32.gmra.mxu0 %v1666
        %v1726 = vpop.f32.mrf.mxu0
        %v1727 = vadd.f32 0.0, %v1726
        %1728 = vmatmul.f32.gmra.mxu0 %v1669
        %v1729 = vpop.f32.mrf.mxu0
        %1730 = vdwg.mxu0
        %v1731 = vadd.f32 %v1597, %v1692
        %v1732 = vadd.f32 %v1598, %v1697
        %v1733 = vadd.f32 %v1599, %v1702
        %v1734 = vadd.f32 %v1600, %v1707
        %v1735 = vadd.f32 %v1601, %v1712
        %v1736 = vadd.f32 %v1602, %v1717
        %v1737 = vadd.f32 %v1603, %v1722
        %v1738 = vadd.f32 %v1604, %v1727
        %v1739 = vld [vmem:[#allocation2 + $0x20] sm:$0xff]
        %v1740 = vld [vmem:[#allocation2 + $0x28] sm:$0xff]
        %v1741 = vld [vmem:[#allocation2 + $0x30] sm:$0xff]
        %v1742 = vld [vmem:[#allocation2 + $0x38] sm:$0xff]
        %v1743 = vld [vmem:[#allocation2 + $0x40] sm:$0xff]
        %v1744 = vld [vmem:[#allocation2 + $0x48] sm:$0xff]
        %v1745 = vld [vmem:[#allocation2 + $0x50] sm:$0xff]
        %v1746 = vld [vmem:[#allocation2 + $0x58] sm:$0xff]
        %v1747 = vld [vmem:[#allocation2 + $0x60] sm:$0xff]
        %v1748 = vld [vmem:[#allocation2 + $0x68] sm:$0xff]
        %v1749 = vld [vmem:[#allocation2 + $0x70] sm:$0xff]
        %v1750 = vld [vmem:[#allocation2 + $0x78] sm:$0xff]
        %v1751 = vld [vmem:[#allocation2 + $0x80] sm:$0xff]
        %v1752 = vld [vmem:[#allocation2 + $0x88] sm:$0xff]
        %v1753 = vld [vmem:[#allocation2 + $0x90] sm:$0xff]
        %v1754 = vld [vmem:[#allocation2 + $0x98] sm:$0xff]
        %s1755 = scalar_lea.vmem %s3, 32
        %v1756 = vld [vmem:[%s1755] sm:$0xf]
        %v1758 = vsel %vm610, %v1739, 0
        %v1761 = vsel %vm610, %v1740, 0
        %v1764 = vsel %vm610, %v1741, 0
        %v1767 = vsel %vm610, %v1742, 0
        %v1770 = vsel %vm610, %v1743, 0
        %v1773 = vsel %vm610, %v1744, 0
        %v1776 = vsel %vm610, %v1745, 0
        %v1779 = vsel %vm610, %v1746, 0
        %v1782 = vsel %vm610, %v1747, 0
        %v1785 = vsel %vm610, %v1748, 0
        %v1788 = vsel %vm610, %v1749, 0
        %v1791 = vsel %vm610, %v1750, 0
        %v1794 = vsel %vm610, %v1751, 0
        %v1797 = vsel %vm610, %v1752, 0
        %v1800 = vsel %vm610, %v1753, 0
        %v1803 = vsel %vm610, %v1754, 0
        %v1806 = vsel %vm766, %v1756, 0
        %1808 = vmatpush.msra.mxu0 0.0
        %1809 = vmatpush.msra.mxu0 0.0
        %1810 = vmatpush.msra.mxu0 0.0
        %1811 = vmatpush.msra.mxu0 0.0
        %1812 = vmatpush.msra.mxu0 0.0
        %1813 = vmatpush.msra.mxu0 0.0
        %1814 = vmatpush.msra.mxu0 0.0
        %1815 = vmatpush.msra.mxu0 0.0
        %1816 = vmatpush.msra.mxu0 0.0
        %1817 = vmatpush.msra.mxu0 0.0
        %1818 = vmatpush.msra.mxu0 0.0
        %1819 = vmatpush.msra.mxu0 0.0
        %1820 = vmatpush.msra.mxu0 0.0
        %1821 = vmatpush.msra.mxu0 0.0
        %1822 = vmatpush.msra.mxu0 0.0
        %1823 = vmatpush.msra.mxu0 %v1806
        %1824 = vmatmul.f32.gmra.mxu0 %v1758
        %v1825 = vpop.f32.mrf.mxu0
        %v1826 = vadd.f32 0.0, %v1825
        %1827 = vmatmul.f32.gmra.mxu0 %v1761
        %v1828 = vpop.f32.mrf.mxu0
        %1829 = vmatmul.f32.gmra.mxu0 %v1764
        %v1830 = vpop.f32.mrf.mxu0
        %v1831 = vadd.f32 0.0, %v1830
        %1832 = vmatmul.f32.gmra.mxu0 %v1767
        %v1833 = vpop.f32.mrf.mxu0
        %1834 = vmatmul.f32.gmra.mxu0 %v1770
        %v1835 = vpop.f32.mrf.mxu0
        %v1836 = vadd.f32 0.0, %v1835
        %1837 = vmatmul.f32.gmra.mxu0 %v1773
        %v1838 = vpop.f32.mrf.mxu0
        %1839 = vmatmul.f32.gmra.mxu0 %v1776
        %v1840 = vpop.f32.mrf.mxu0
        %v1841 = vadd.f32 0.0, %v1840
        %1842 = vmatmul.f32.gmra.mxu0 %v1779
        %v1843 = vpop.f32.mrf.mxu0
        %1844 = vmatmul.f32.gmra.mxu0 %v1782
        %v1845 = vpop.f32.mrf.mxu0
        %v1846 = vadd.f32 0.0, %v1845
        %1847 = vmatmul.f32.gmra.mxu0 %v1785
        %v1848 = vpop.f32.mrf.mxu0
        %1849 = vmatmul.f32.gmra.mxu0 %v1788
        %v1850 = vpop.f32.mrf.mxu0
        %v1851 = vadd.f32 0.0, %v1850
        %1852 = vmatmul.f32.gmra.mxu0 %v1791
        %v1853 = vpop.f32.mrf.mxu0
        %1854 = vmatmul.f32.gmra.mxu0 %v1794
        %v1855 = vpop.f32.mrf.mxu0
        %v1856 = vadd.f32 0.0, %v1855
        %1857 = vmatmul.f32.gmra.mxu0 %v1797
        %v1858 = vpop.f32.mrf.mxu0
        %1859 = vmatmul.f32.gmra.mxu0 %v1800
        %v1860 = vpop.f32.mrf.mxu0
        %v1861 = vadd.f32 0.0, %v1860
        %1862 = vmatmul.f32.gmra.mxu0 %v1803
        %v1863 = vpop.f32.mrf.mxu0
        %1864 = vdwg.mxu0
        %v1865 = vadd.f32 %v1731, %v1826
        %v1866 = vadd.f32 %v1732, %v1831
        %v1867 = vadd.f32 %v1733, %v1836
        %v1868 = vadd.f32 %v1734, %v1841
        %v1869 = vadd.f32 %v1735, %v1846
        %v1870 = vadd.f32 %v1736, %v1851
        %v1871 = vadd.f32 %v1737, %v1856
        %v1872 = vadd.f32 %v1738, %v1861
        %v1873 = vld [vmem:[%s4] sm:$0x1]
        %v1875 = vperm.slane %v1873, 0
        %v1877 = vadd.f32 %v1865, %v1875
        %v1878 = vadd.f32 %v1866, %v1875
        %v1879 = vadd.f32 %v1867, %v1875
        %v1880 = vadd.f32 %v1868, %v1875
        %v1881 = vadd.f32 %v1869, %v1875
        %v1882 = vadd.f32 %v1870, %v1875
        %v1883 = vadd.f32 %v1871, %v1875
        %v1884 = vadd.f32 %v1872, %v1875
        %v1885 = vmax.f32 %v1877, 0.0
        %v1886 = vmax.f32 %v1878, 0.0
        %v1887 = vmax.f32 %v1879, 0.0
        %v1888 = vmax.f32 %v1880, 0.0
        %v1889 = vmax.f32 %v1881, 0.0
        %v1890 = vmax.f32 %v1882, 0.0
        %v1891 = vmax.f32 %v1883, 0.0
        %v1892 = vmax.f32 %v1884, 0.0
        %v1893 = vld [vmem:[%s5] sm:$0xf]
        %v1894 = vld [vmem:[%s6] sm:$0x1]
        %v1896 = vperm.slane %v1894, 0
        %v1899 = vsel %vm610, %v1885, 0
        %v1902 = vsel %vm610, %v1886, 0
        %v1905 = vsel %vm610, %v1887, 0
        %v1908 = vsel %vm610, %v1888, 0
        %v1911 = vsel %vm610, %v1889, 0
        %v1914 = vsel %vm610, %v1890, 0
        %v1917 = vsel %vm610, %v1891, 0
        %v1920 = vsel %vm610, %v1892, 0
        %v1923 = vsel %vm766, %v1893, 0
        %1925 = vmatpush.msra.mxu0 0.0
        %1926 = vmatpush.msra.mxu0 0.0
        %1927 = vmatpush.msra.mxu0 0.0
        %1928 = vmatpush.msra.mxu0 0.0
        %1929 = vmatpush.msra.mxu0 0.0
        %1930 = vmatpush.msra.mxu0 0.0
        %1931 = vmatpush.msra.mxu0 0.0
        %1932 = vmatpush.msra.mxu0 0.0
        %1933 = vmatpush.msra.mxu0 0.0
        %1934 = vmatpush.msra.mxu0 0.0
        %1935 = vmatpush.msra.mxu0 0.0
        %1936 = vmatpush.msra.mxu0 0.0
        %1937 = vmatpush.msra.mxu0 0.0
        %1938 = vmatpush.msra.mxu0 0.0
        %1939 = vmatpush.msra.mxu0 0.0
        %1940 = vmatpush.msra.mxu0 %v1923
        %1941 = vmatmul.f32.gmra.mxu0 %v1899
        %v1942 = vpop.f32.mrf.mxu0
        %v1943 = vadd.f32 %v1896, %v1942
        %1944 = vmatmul.f32.gmra.mxu0 %v1902
        %v1945 = vpop.f32.mrf.mxu0
        %v1946 = vadd.f32 %v1896, %v1945
        %1947 = vmatmul.f32.gmra.mxu0 %v1905
        %v1948 = vpop.f32.mrf.mxu0
        %v1949 = vadd.f32 %v1896, %v1948
        %1950 = vmatmul.f32.gmra.mxu0 %v1908
        %v1951 = vpop.f32.mrf.mxu0
        %v1952 = vadd.f32 %v1896, %v1951
        %1953 = vmatmul.f32.gmra.mxu0 %v1911
        %v1954 = vpop.f32.mrf.mxu0
        %v1955 = vadd.f32 %v1896, %v1954
        %1956 = vmatmul.f32.gmra.mxu0 %v1914
        %v1957 = vpop.f32.mrf.mxu0
        %v1958 = vadd.f32 %v1896, %v1957
        %1959 = vmatmul.f32.gmra.mxu0 %v1917
        %v1960 = vpop.f32.mrf.mxu0
        %v1961 = vadd.f32 %v1896, %v1960
        %1962 = vmatmul.f32.gmra.mxu0 %v1920
        %v1963 = vpop.f32.mrf.mxu0
        %v1964 = vadd.f32 %v1896, %v1963
        %1965 = vdwg.mxu0
        %v1966 = vld [vmem:[%s7] sm:$0xff]
        %v1967 = vld [vmem:[%s8] sm:$0x1]
        %v1969 = vperm.slane %v1967, 0
        %1971 = vmatpush.msra.mxu0 0.0
        %1972 = vmatpush.msra.mxu0 0.0
        %1973 = vmatpush.msra.mxu0 0.0
        %1974 = vmatpush.msra.mxu0 0.0
        %1975 = vmatpush.msra.mxu0 0.0
        %1976 = vmatpush.msra.mxu0 0.0
        %1977 = vmatpush.msra.mxu0 0.0
        %1978 = vmatpush.msra.mxu0 0.0
        %1979 = vmatpush.msra.mxu0 0.0
        %1980 = vmatpush.msra.mxu0 0.0
        %1981 = vmatpush.msra.mxu0 0.0
        %1982 = vmatpush.msra.mxu0 0.0
        %1983 = vmatpush.msra.mxu0 0.0
        %1984 = vmatpush.msra.mxu0 0.0
        %1985 = vmatpush.msra.mxu0 0.0
        %1986 = vmatpush.msra.mxu0 %v1966
        %1987 = vmatmul.f32.gmra.mxu0 %v370
        %v1988 = vpop.f32.mrf.mxu0
        %v1989 = vadd.f32 %v1969, %v1988
        %1990 = vmatmul.f32.gmra.mxu0 %v373
        %v1991 = vpop.f32.mrf.mxu0
        %v1992 = vadd.f32 %v1969, %v1991
        %1993 = vmatmul.f32.gmra.mxu0 %v376
        %v1994 = vpop.f32.mrf.mxu0
        %v1995 = vadd.f32 %v1969, %v1994
        %1996 = vmatmul.f32.gmra.mxu0 %v379
        %v1997 = vpop.f32.mrf.mxu0
        %v1998 = vadd.f32 %v1969, %v1997
        %1999 = vmatmul.f32.gmra.mxu0 %v382
        %v2000 = vpop.f32.mrf.mxu0
        %v2001 = vadd.f32 %v1969, %v2000
        %2002 = vmatmul.f32.gmra.mxu0 %v385
        %v2003 = vpop.f32.mrf.mxu0
        %v2004 = vadd.f32 %v1969, %v2003
        %2005 = vmatmul.f32.gmra.mxu0 %v388
        %v2006 = vpop.f32.mrf.mxu0
        %v2007 = vadd.f32 %v1969, %v2006
        %2008 = vmatmul.f32.gmra.mxu0 %v391
        %v2009 = vpop.f32.mrf.mxu0
        %v2010 = vadd.f32 %v1969, %v2009
        %2011 = vdwg.mxu0
        %v2012 = vadd.f32 %v1943, %v1989
        %v2013 = vadd.f32 %v1946, %v1992
        %v2014 = vadd.f32 %v1949, %v1995
        %v2015 = vadd.f32 %v1952, %v1998
        %v2016 = vadd.f32 %v1955, %v2001
        %v2017 = vadd.f32 %v1958, %v2004
        %v2018 = vadd.f32 %v1961, %v2007
        %v2019 = vadd.f32 %v1964, %v2010
        %v2020 = vmax.f32 %v2012, 0.0
        %v2021 = vmax.f32 %v2013, 0.0
        %v2022 = vmax.f32 %v2014, 0.0
        %v2023 = vmax.f32 %v2015, 0.0
        %v2024 = vmax.f32 %v2016, 0.0
        %v2025 = vmax.f32 %v2017, 0.0
        %v2026 = vmax.f32 %v2018, 0.0
        %v2027 = vmax.f32 %v2019, 0.0
        %vm2028 = vcmask 130048
        %2029 = vst.msk [vmem:[%s325] sm:$0xff] %vm2028, %v2020
        %2030 = vst.msk [vmem:[%s325 + $0x8] sm:$0xff] %vm2028, %v2021
        %2031 = vst.msk [vmem:[%s325 + $0x10] sm:$0xff] %vm2028, %v2022
        %2032 = vst.msk [vmem:[%s325 + $0x18] sm:$0xff] %vm2028, %v2023
        %2033 = vst.msk [vmem:[%s325 + $0x20] sm:$0xff] %vm2028, %v2024
        %2034 = vst.msk [vmem:[%s325 + $0x28] sm:$0xff] %vm2028, %v2025
        %2035 = vst.msk [vmem:[%s325 + $0x30] sm:$0xff] %vm2028, %v2026
        %2036 = vst.msk [vmem:[%s325 + $0x38] sm:$0xff] %vm2028, %v2027
        %s2037 = sand.u32 %s225, 1
        %s2038 = scalar_lea.sflag [#allocation7], %s2037
        %s2039 = sand.u32 %s225, 1
        %s2040 = smul.addr %s2039, 64
        %s2041 = scalar_lea.vmem [#allocation6], %s2040
        // Predicated region
        $region57: #{bottleneck_forward.1} parent=55 // pred_check
          %p2042 = pneg %p235
        $region58: #{bottleneck_forward.1} parent=55 // pred_check_branch
          %2044 = sbr.rel (%p2042) target = $region60
        $region59: #{bottleneck_forward.1} parent=55 // pred_region
          %2046 = vsyncadd %s2038, 0
          %s2047 = smul.addr %s23, 8
          %s2048 = smul.addr %s2047, 8
          %s2049 = scalar_lea.hbm %s9, %s2048
          %s2050 = sshll.u32 %s2041, 4
          %s2051 = int_to_ptr.vmem [resolvable:$true] %s2050
          %s2052 = sshll.u32 %s2049, 4
          %s2053 = int_to_ptr.hbm [resolvable:$true] %s2052
          %2058 = dma.vmem_to_hbm [thread:$0]  %s2051, 1024, %s2053, %s2038, 128, 128, 8
        $region60: #{bottleneck_forward.1} parent=55 // pred_fallthru
          _
      $region56: #{bottleneck_forward.1} parent=5 // pred_fallthru
        _
      %p2059 = scmp.le.s32.totalorder 2, %s18
      // Predicated region
      $region61: #{bottleneck_forward.1} parent=5 // pred_check
        %p2060 = pneg %p2059
      $region62: #{bottleneck_forward.1} parent=5 // pred_check_branch
        %2062 = sbr.rel (%p2060) target = $region64
      $region63: #{bottleneck_forward.1} parent=5 // pred_region
        %s2063 = ssub.s32 %s18, 2
        // Predicated region
        $region65: #{bottleneck_forward.1} parent=63 // pred_check
          %p2064 = pneg %p241
        $region66: #{bottleneck_forward.1} parent=63 // pred_check_branch
          %2066 = sbr.rel (%p2064) target = $region68
        $region67: #{bottleneck_forward.1} parent=63 // pred_region
          %s2067 = sand.u32 %s226, 1
          %s2068 = scalar_lea.sflag [#allocation7], %s2067
          %s2069 = sand.u32 %s226, 1
          %s2070 = smul.addr %s2069, 64
          %s2071 = scalar_lea.vmem [#allocation6], %s2070
          %2073 = dma.done %s2068, 1024
        $region68: #{bottleneck_forward.1} parent=63 // pred_fallthru
          _
      $region64: #{bottleneck_forward.1} parent=5 // pred_fallthru
        _
    $region6: #{bottleneck_forward.1} parent=1 // loop_footer
      %s22 = sadd.s32 1, %s18
    $region7: #{bottleneck_forward.1} parent=1 // loop_footer_branch
      %17 = sbr.rel target = $region3
    $region8: #{bottleneck_forward.1} parent=1 // loop_exit
      _
    %2074 = vsyncpa [#allocation7], 1
    %s2075 = scalar_lea.sflag [#allocation7], 1
    %2076 = vsyncpa %s2075, 1

</llo_original>
